<compile_context>
chip_gen: v7x
topology: tpu7x:2x2x1
jax: 0.10.0
libtpu: 0.0.40
codegen_flags: <defaults>
</compile_context>

<pallas_src>
import math
import numpy as np
import jax
import jax.numpy as jnp
from jax import lax
from jax.experimental import pallas as pl
from jax.experimental.pallas import tpu as pltpu

# ---------------- config (consistent with LMConfig semantics, toy sizes) ----------------
B, S = 2, 16
BS = B * S                                # 32 rows after collapsing batch into the row dim
DIM = 128
N_HEADS = 4
N_KV_HEADS = 2
HEAD_DIM = DIM // N_HEADS                 # 32
N_REP = N_HEADS // N_KV_HEADS             # 2
DKV = N_KV_HEADS * HEAD_DIM               # 64
MULTIPLE_OF = 64
# FeedForward.__init__: hidden = multiple_of * ceil((2*4*dim/3)/multiple_of)
HIDDEN = MULTIPLE_OF * ((int(2 * 4 * DIM / 3) + MULTIPLE_OF - 1) // MULTIPLE_OF)  # 384
EPS = 1e-5                                # RMSNorm eps (sensible value for the synthetic config)
ROPE_THETA = 1e6
SCALE = 1.0 / math.sqrt(HEAD_DIM)

# fused projection layout along columns: [ q | k | v | pair_swap(q) | pair_swap(k) ]
Q_OFF = 0
K_OFF = DIM                               # 128
V_OFF = DIM + DKV                         # 192
QS_OFF = DIM + 2 * DKV                    # 256
KS_OFF = 2 * DIM + 2 * DKV                # 384
QKVS_W = 2 * DIM + 3 * DKV                # 448

REF_PREC = lax.Precision.HIGHEST          # reference (ground truth) only


# ------------------ Pallas kernel: whole transformer block in one invocation ------------------
def transformer_block_kernel(x_ref, wqkvs_ref, wo_ref, w13_ref, w2_ref,
                             nrm_ref, rope_ref, out_ref, ao_ref):
    x = x_ref[...]                                      # (BS, DIM) f32

    def rmsnorm(v, w):                                  # w: (1, DIM), broadcast over rows
        ms = jnp.mean(v * v, axis=-1, keepdims=True)
        return w * (v * lax.rsqrt(ms + EPS))

    # ---- attention branch ----
    xn = rmsnorm(x, nrm_ref[0:1, :])
    # single fused projection (bf16 operands, f32 accumulation, one MXU pass)
    qkv = jnp.dot(xn.astype(jnp.bfloat16), wqkvs_ref[...],
                  preferred_element_type=jnp.float32)   # (BS, 448)

    # RoPE (interleaved complex rotation): out = x * cos_pair + pair_swap(x) * sin_signed.
    # pair_swap(q)/pair_swap(k) come straight out of the fused matmul (weight columns were
    # pre-permuted host-side) -> no in-kernel permutation matmul, pure VPU multiply-add.
    cos_q = rope_ref[:, :DIM]
    sin_q = rope_ref[:, DIM:2 * DIM]
    q = qkv[:, Q_OFF:Q_OFF + DIM] * cos_q + qkv[:, QS_OFF:QS_OFF + DIM] * sin_q
    k = (qkv[:, K_OFF:K_OFF + DKV] * cos_q[:, :DKV]
         + qkv[:, KS_OFF:KS_OFF + DKV] * sin_q[:, :DKV])
    v = qkv[:, V_OFF:V_OFF + DKV]

    q_bf = q.astype(jnp.bfloat16)
    k_bf = k.astype(jnp.bfloat16)
    v_bf = v.astype(jnp.bfloat16)

    # additive causal bias, built once (finite negative: no -inf/NaN edge cases)
    row = lax.broadcasted_iota(jnp.int32, (S, S), 0)
    col = lax.broadcasted_iota(jnp.int32, (S, S), 1)
    bias = jnp.where(row >= col, 0.0, -1e30).astype(jnp.float32)

    # per-(batch, head) attention on static row/col slices; head outputs are written into a
    # (BS, DIM) f32 VMEM scratch (no lane-level concatenate of 32-wide fragments).
    for b in range(B):
        r0 = b * S
        for h in range(N_HEADS):
            kvh = h // N_REP                            # GQA repeat_kv mapping
            qh = q_bf[r0:r0 + S, h * HEAD_DIM:(h + 1) * HEAD_DIM]
            kh = k_bf[r0:r0 + S, kvh * HEAD_DIM:(kvh + 1) * HEAD_DIM]
            vh = v_bf[r0:r0 + S, kvh * HEAD_DIM:(kvh + 1) * HEAD_DIM]
            s = lax.dot_general(qh, kh, (((1,), (1,)), ((), ())),
                                preferred_element_type=jnp.float32)
            s = s * SCALE + bias
            m = jnp.max(s, axis=-1, keepdims=True)
            p = jnp.exp(s - m)
            denom = jnp.sum(p, axis=-1, keepdims=True)
            a = p * pl.reciprocal(denom, approx=True)   # EUP slot instead of a divide
            ao_ref[r0:r0 + S, h * HEAD_DIM:(h + 1) * HEAD_DIM] = jnp.dot(
                a.astype(jnp.bfloat16), vh, preferred_element_type=jnp.float32)

    # single K=128 WO matmul over the scratch-assembled head outputs
    h_res = x + jnp.dot(ao_ref[...].astype(jnp.bfloat16), wo_ref[...],
                        preferred_element_type=jnp.float32)

    # ---- feed-forward branch (fused W1|W3, split at lane-aligned column HIDDEN=384) ----
    hn = rmsnorm(h_res, nrm_ref[1:2, :])
    h13 = jnp.dot(hn.astype(jnp.bfloat16), w13_ref[...],
                  preferred_element_type=jnp.float32)   # (BS, 2*HIDDEN)
    g = h13[:, :HIDDEN] * h13[:, HIDDEN:2 * HIDDEN]
    g = g * jax.nn.sigmoid(g)   # NOTE: F.silu(w1(x) * w3(x)) — silu of the *product*, per the module
    ffn = jnp.dot(g.astype(jnp.bfloat16), w2_ref[...], preferred_element_type=jnp.float32)

    out_ref[...] = h_res + ffn


def transformer_block(x, fused):
    w_qkvs, wo, w13, w2, nrm, rope = fused
    x2 = x.reshape(BS, DIM)                             # collapse batch into the row dim
    vmem = pl.BlockSpec(memory_space=pltpu.MemorySpace.VMEM)   # whole array resident in VMEM
    out = pl.pallas_call(
        transformer_block_kernel,
        out_shape=jax.ShapeDtypeStruct((BS, DIM), jnp.float32),
        in_specs=[vmem] * 7,
        out_specs=vmem,
        scratch_shapes=[pltpu.VMEM((BS, DIM), jnp.float32)],   # attention-output accumulator
    )(x2, w_qkvs, wo, w13, w2, nrm, rope)
    return out.reshape(B, S, DIM)


# ------------------ parameter / RoPE-table setup (host-side, one-time weight prep) ------------------
def make_rope_tables():
    freqs = 1.0 / (ROPE_THETA ** (np.arange(0, HEAD_DIM, 2, dtype=np.float64) / HEAD_DIM))
    t = np.arange(S, dtype=np.float64)
    ang = np.outer(t, freqs)                                           # (S, HEAD_DIM//2)
    cos = np.cos(ang).astype(np.float32)
    sin = np.sin(ang).astype(np.float32)

    cos_pair = np.repeat(cos, 2, axis=1)                               # (S, HEAD_DIM): c0,c0,c1,c1,...
    sin_signed = np.stack([-sin, sin], axis=-1).reshape(S, HEAD_DIM)   # -s0,+s0,-s1,+s1,...

    cos_q = np.tile(cos_pair, (B, N_HEADS))                            # (BS, DIM); row r -> pos r % S
    sin_q = np.tile(sin_signed, (B, N_HEADS))                          # (BS, DIM)
    rope = np.concatenate([cos_q, sin_q], axis=1)                      # (BS, 2*DIM)
    return jnp.asarray(rope), cos, sin


def make_params(key):
    ks = jax.random.split(key, 9)
    init = lambda k, shp: 0.05 * jax.random.normal(k, shp, jnp.float32)
    wq = init(ks[0], (DIM, DIM))
    wk = init(ks[1], (DIM, DKV))
    wv = init(ks[2], (DIM, DKV))
    wo = init(ks[3], (DIM, DIM))
    w1 = init(ks[4], (DIM, HIDDEN))
    w2 = init(ks[5], (HIDDEN, DIM))
    w3 = init(ks[6], (DIM, HIDDEN))
    anorm = 1.0 + 0.1 * jax.random.normal(ks[7], (1, DIM), jnp.float32)
    fnorm = 1.0 + 0.1 * jax.random.normal(ks[8], (1, DIM), jnp.float32)
    return (wq, wk, wv, wo, w1, w2, w3, anorm, fnorm)


def pack_params(params):
    """One-time host-side weight prep: fuse QKV (+ pair-swapped copies for RoPE), fuse W1|W3,
    stack norm weights, cast matmul weights to bf16."""
    wq, wk, wv, wo, w1, w2, w3, anorm, fnorm = params

    def pair_swap_idx(n):   # [1,0,3,2,...] — adjacent-pair swap of output columns
        return np.ascontiguousarray(np.arange(n).reshape(-1, 2)[:, ::-1].reshape(-1))

    wq_sw = wq[:, pair_swap_idx(DIM)]
    wk_sw = wk[:, pair_swap_idx(DKV)]
    w_qkvs = jnp.concatenate([wq, wk, wv, wq_sw, wk_sw], axis=1).astype(jnp.bfloat16)  # (DIM, 448)
    w13 = jnp.concatenate([w1, w3], axis=1).astype(jnp.bfloat16)                       # (DIM, 768)
    nrm = jnp.concatenate([anorm, fnorm], axis=0)                                      # (2, DIM) f32
    return (w_qkvs, wo.astype(jnp.bfloat16), w13, w2.astype(jnp.bfloat16), nrm)


# ------------------ pure-JAX f32 reference (mirrors the PyTorch forward exactly) ------------------
def ref_forward(x, params, cos, sin):
    wq, wk, wv, wo, w1, w2, w3, anorm, fnorm = params
    mm = lambda a, b: jnp.dot(a, b, precision=REF_PREC)

    def rms(v, w):
        return w * (v * lax.rsqrt(jnp.mean(v * v, -1, keepdims=True) + EPS))

    xn = rms(x, anorm)
    q = mm(xn, wq).reshape(B, S, N_HEADS, HEAD_DIM)
    k = mm(xn, wk).reshape(B, S, N_KV_HEADS, HEAD_DIM)
    v = mm(xn, wv).reshape(B, S, N_KV_HEADS, HEAD_DIM)

    c = jnp.asarray(cos)[None, :, None, :]
    s_ = jnp.asarray(sin)[None, :, None, :]

    def rope(t):
        tr = t.reshape(*t.shape[:-1], HEAD_DIM // 2, 2)
        te, to = tr[..., 0], tr[..., 1]
        return jnp.stack([te * c - to * s_, te * s_ + to * c], axis=-1).reshape(t.shape)

    q, k = rope(q), rope(k)
    k = jnp.repeat(k, N_REP, axis=2)
    v = jnp.repeat(v, N_REP, axis=2)
    q, k, v = (t.transpose(0, 2, 1, 3) for t in (q, k, v))

    scores = jnp.einsum('bhqd,bhkd->bhqk', q, k, precision=REF_PREC) * SCALE
    mask = jnp.tril(jnp.ones((S, S), bool))
    scores = jnp.where(mask, scores, -jnp.inf)
    a = jax.nn.softmax(scores, axis=-1)
    o = jnp.einsum('bhqk,bhkd->bhqd', a, v, precision=REF_PREC)
    o = o.transpose(0, 2, 1, 3).reshape(B, S, DIM)

    h = x + mm(o, wo)
    hn = rms(h, fnorm)
    g = mm(hn, w1) * mm(hn, w3)
    g = g * jax.nn.sigmoid(g)
    return h + mm(g, w2)


if __name__ == "__main__":
    key = jax.random.PRNGKey(0)
    kx, kp = jax.random.split(key)
    x = jax.random.normal(kx, (B, S, DIM), jnp.float32)
    params = make_params(kp)
    fused_w = pack_params(params)
    rope, cos, sin = make_rope_tables()

    out = transformer_block(x, fused_w + (rope,))
    out = jax.block_until_ready(out)

    ref = jax.block_until_ready(ref_forward(x, params, cos, sin))
    # tolerance sized for bf16 MXU operands/weights (single-pass) vs. the f32 HIGHEST reference
    np.testing.assert_allclose(np.asarray(out), np.asarray(ref), rtol=2e-2, atol=2e-2)

    print("KERNEL_OK")
</pallas_src>

<mosaic_0001>
module attributes {stable_mosaic.version = 11 : i64} {
  func.func @transformer_block_kernel(%arg0: memref<32x128xf32, #tpu.memory_space<vmem>>, %arg1: memref<128x448xbf16, #tpu.memory_space<vmem>>, %arg2: memref<128x128xbf16, #tpu.memory_space<vmem>>, %arg3: memref<128x768xbf16, #tpu.memory_space<vmem>>, %arg4: memref<384x128xbf16, #tpu.memory_space<vmem>>, %arg5: memref<2x128xf32, #tpu.memory_space<vmem>>, %arg6: memref<32x256xf32, #tpu.memory_space<vmem>>, %arg7: memref<32x128xf32, #tpu.memory_space<vmem>>, %arg8: memref<32x128xf32, #tpu.memory_space<vmem>>) attributes {dimension_semantics = [], scalar_prefetch = 0 : i64, scratch_operands = 1 : i64, tpu.core_type = #tpu.core_type<tc>} {
    %c0 = arith.constant 0 : index
    %c0_0 = arith.constant 0 : index
    %0 = vector.load %arg0[%c0, %c0_0] : memref<32x128xf32, #tpu.memory_space<vmem>>, vector<32x128xf32>
    %c0_1 = arith.constant 0 : index
    %c0_2 = arith.constant 0 : index
    %1 = vector.load %arg5[%c0_1, %c0_2] : memref<2x128xf32, #tpu.memory_space<vmem>>, vector<1x128xf32>
    %2 = arith.mulf %0, %0 : vector<32x128xf32>
    %cst = arith.constant dense<0.000000e+00> : vector<32xf32>
    %3 = vector.multi_reduction <add>, %2, %cst [1] : vector<32x128xf32> to vector<32xf32>
    %4 = vector.shape_cast %3 : vector<32xf32> to vector<32x1xf32>
    %cst_3 = arith.constant 1.280000e+02 : f32
    %5 = vector.broadcast %cst_3 : f32 to vector<32x1xf32>
    %6 = arith.divf %4, %5 : vector<32x1xf32>
    %cst_4 = arith.constant 9.99999974E-6 : f32
    %7 = vector.broadcast %cst_4 : f32 to vector<32x1xf32>
    %8 = arith.addf %6, %7 : vector<32x1xf32>
    %9 = math.rsqrt %8 : vector<32x1xf32>
    %10 = vector.broadcast %9 : vector<32x1xf32> to vector<32x128xf32>
    %11 = arith.mulf %0, %10 : vector<32x128xf32>
    %12 = vector.broadcast %1 : vector<1x128xf32> to vector<32x128xf32>
    %13 = arith.mulf %12, %11 : vector<32x128xf32>
    %14 = arith.truncf %13 : vector<32x128xf32> to vector<32x128xbf16>
    %c0_5 = arith.constant 0 : index
    %c0_6 = arith.constant 0 : index
    %15 = vector.load %arg1[%c0_5, %c0_6] : memref<128x448xbf16, #tpu.memory_space<vmem>>, vector<128x448xbf16>
    %cst_7 = arith.constant dense<0.000000e+00> : vector<32x448xf32>
    %16 = tpu.matmul %14, %15, %cst_7 {dimension_numbers = #tpu.dot_dimension_numbers<[1], [0], [0], [1], [0, 0, 1, 1], [], []>} : vector<32x128xbf16>, vector<128x448xbf16>, vector<32x448xf32> -> vector<32x448xf32>
    %c0_8 = arith.constant 0 : index
    %c0_9 = arith.constant 0 : index
    %17 = vector.load %arg6[%c0_8, %c0_9] : memref<32x256xf32, #tpu.memory_space<vmem>>, vector<32x128xf32>
    %c0_10 = arith.constant 0 : index
    %c128 = arith.constant 128 : index
    %18 = vector.load %arg6[%c0_10, %c128] : memref<32x256xf32, #tpu.memory_space<vmem>>, vector<32x128xf32>
    %19 = vector.extract_strided_slice %16 {offsets = [0, 0], sizes = [32, 128], strides = [1, 1]} : vector<32x448xf32> to vector<32x128xf32>
    %20 = arith.mulf %19, %17 : vector<32x128xf32>
    %21 = vector.extract_strided_slice %16 {offsets = [0, 256], sizes = [32, 128], strides = [1, 1]} : vector<32x448xf32> to vector<32x128xf32>
    %22 = arith.mulf %21, %18 : vector<32x128xf32>
    %23 = arith.addf %20, %22 : vector<32x128xf32>
    %24 = vector.extract_strided_slice %16 {offsets = [0, 128], sizes = [32, 64], strides = [1, 1]} : vector<32x448xf32> to vector<32x64xf32>
    %25 = vector.extract_strided_slice %17 {offsets = [0, 0], sizes = [32, 64], strides = [1, 1]} : vector<32x128xf32> to vector<32x64xf32>
    %26 = arith.mulf %24, %25 : vector<32x64xf32>
    %27 = vector.extract_strided_slice %16 {offsets = [0, 384], sizes = [32, 64], strides = [1, 1]} : vector<32x448xf32> to vector<32x64xf32>
    %28 = vector.extract_strided_slice %18 {offsets = [0, 0], sizes = [32, 64], strides = [1, 1]} : vector<32x128xf32> to vector<32x64xf32>
    %29 = arith.mulf %27, %28 : vector<32x64xf32>
    %30 = arith.addf %26, %29 : vector<32x64xf32>
    %31 = vector.extract_strided_slice %16 {offsets = [0, 192], sizes = [32, 64], strides = [1, 1]} : vector<32x448xf32> to vector<32x64xf32>
    %32 = arith.truncf %23 : vector<32x128xf32> to vector<32x128xbf16>
    %33 = arith.truncf %30 : vector<32x64xf32> to vector<32x64xbf16>
    %34 = arith.truncf %31 : vector<32x64xf32> to vector<32x64xbf16>
    %35 = tpu.iota {dimensions = array<i32: 0>} : vector<16x16xi32>
    %36 = tpu.iota {dimensions = array<i32: 1>} : vector<16x16xi32>
    %37 = arith.cmpi sge, %35, %36 : vector<16x16xi32>
    %cst_11 = arith.constant 0.000000e+00 : f32
    %cst_12 = arith.constant -1.000000e+30 : f32
    %38 = vector.broadcast %cst_11 : f32 to vector<16x16xf32>
    %39 = vector.broadcast %cst_12 : f32 to vector<16x16xf32>
    %40 = arith.select %37, %38, %39 : vector<16x16xi1>, vector<16x16xf32>
    %41 = vector.extract_strided_slice %32 {offsets = [0, 0], sizes = [16, 32], strides = [1, 1]} : vector<32x128xbf16> to vector<16x32xbf16>
    %42 = vector.extract_strided_slice %33 {offsets = [0, 0], sizes = [16, 32], strides = [1, 1]} : vector<32x64xbf16> to vector<16x32xbf16>
    %43 = vector.extract_strided_slice %34 {offsets = [0, 0], sizes = [16, 32], strides = [1, 1]} : vector<32x64xbf16> to vector<16x32xbf16>
    %cst_13 = arith.constant dense<0.000000e+00> : vector<16x16xf32>
    %44 = tpu.matmul %41, %42, %cst_13 {dimension_numbers = #tpu.dot_dimension_numbers<[1], [1], [0], [0], [0, 0, 1, 0], [], []>} : vector<16x32xbf16>, vector<16x32xbf16>, vector<16x16xf32> -> vector<16x16xf32>
    %cst_14 = arith.constant 0.176776692 : f32
    %45 = vector.broadcast %cst_14 : f32 to vector<16x16xf32>
    %46 = arith.mulf %44, %45 : vector<16x16xf32>
    %47 = arith.addf %46, %40 : vector<16x16xf32>
    %cst_15 = arith.constant dense<0xFF800000> : vector<16xf32>
    %48 = vector.multi_reduction <maximumf>, %47, %cst_15 [1] : vector<16x16xf32> to vector<16xf32>
    %49 = vector.shape_cast %48 : vector<16xf32> to vector<16x1xf32>
    %50 = vector.broadcast %49 : vector<16x1xf32> to vector<16x16xf32>
    %51 = arith.subf %47, %50 : vector<16x16xf32>
    %52 = math.exp %51 : vector<16x16xf32>
    %cst_16 = arith.constant dense<0.000000e+00> : vector<16xf32>
    %53 = vector.multi_reduction <add>, %52, %cst_16 [1] : vector<16x16xf32> to vector<16xf32>
    %54 = vector.shape_cast %53 : vector<16xf32> to vector<16x1xf32>
    %55 = tpu.reciprocal %54 {approx = true} : vector<16x1xf32> -> vector<16x1xf32>
    %56 = vector.broadcast %55 : vector<16x1xf32> to vector<16x16xf32>
    %57 = arith.mulf %52, %56 : vector<16x16xf32>
    %58 = arith.truncf %57 : vector<16x16xf32> to vector<16x16xbf16>
    %cst_17 = arith.constant dense<0.000000e+00> : vector<16x32xf32>
    %59 = tpu.matmul %58, %43, %cst_17 {dimension_numbers = #tpu.dot_dimension_numbers<[1], [0], [0], [1], [0, 0, 1, 1], [], []>} : vector<16x16xbf16>, vector<16x32xbf16>, vector<16x32xf32> -> vector<16x32xf32>
    %c0_18 = arith.constant 0 : index
    %c0_19 = arith.constant 0 : index
    %60 = vector.load %arg8[%c0_18, %c0_19] : memref<32x128xf32, #tpu.memory_space<vmem>>, vector<16x32xf32>
    tpu.vector_store %arg8[%c0_18, %c0_19], %59 {strides = array<i32>} : memref<32x128xf32, #tpu.memory_space<vmem>>, vector<16x32xf32>,
    %61 = vector.extract_strided_slice %32 {offsets = [0, 32], sizes = [16, 32], strides = [1, 1]} : vector<32x128xbf16> to vector<16x32xbf16>
    %62 = vector.extract_strided_slice %33 {offsets = [0, 0], sizes = [16, 32], strides = [1, 1]} : vector<32x64xbf16> to vector<16x32xbf16>
    %63 = vector.extract_strided_slice %34 {offsets = [0, 0], sizes = [16, 32], strides = [1, 1]} : vector<32x64xbf16> to vector<16x32xbf16>
    %cst_20 = arith.constant dense<0.000000e+00> : vector<16x16xf32>
    %64 = tpu.matmul %61, %62, %cst_20 {dimension_numbers = #tpu.dot_dimension_numbers<[1], [1], [0], [0], [0, 0, 1, 0], [], []>} : vector<16x32xbf16>, vector<16x32xbf16>, vector<16x16xf32> -> vector<16x16xf32>
    %cst_21 = arith.constant 0.176776692 : f32
    %65 = vector.broadcast %cst_21 : f32 to vector<16x16xf32>
    %66 = arith.mulf %64, %65 : vector<16x16xf32>
    %67 = arith.addf %66, %40 : vector<16x16xf32>
    %cst_22 = arith.constant dense<0xFF800000> : vector<16xf32>
    %68 = vector.multi_reduction <maximumf>, %67, %cst_22 [1] : vector<16x16xf32> to vector<16xf32>
    %69 = vector.shape_cast %68 : vector<16xf32> to vector<16x1xf32>
    %70 = vector.broadcast %69 : vector<16x1xf32> to vector<16x16xf32>
    %71 = arith.subf %67, %70 : vector<16x16xf32>
    %72 = math.exp %71 : vector<16x16xf32>
    %cst_23 = arith.constant dense<0.000000e+00> : vector<16xf32>
    %73 = vector.multi_reduction <add>, %72, %cst_23 [1] : vector<16x16xf32> to vector<16xf32>
    %74 = vector.shape_cast %73 : vector<16xf32> to vector<16x1xf32>
    %75 = tpu.reciprocal %74 {approx = true} : vector<16x1xf32> -> vector<16x1xf32>
    %76 = vector.broadcast %75 : vector<16x1xf32> to vector<16x16xf32>
    %77 = arith.mulf %72, %76 : vector<16x16xf32>
    %78 = arith.truncf %77 : vector<16x16xf32> to vector<16x16xbf16>
    %cst_24 = arith.constant dense<0.000000e+00> : vector<16x32xf32>
    %79 = tpu.matmul %78, %63, %cst_24 {dimension_numbers = #tpu.dot_dimension_numbers<[1], [0], [0], [1], [0, 0, 1, 1], [], []>} : vector<16x16xbf16>, vector<16x32xbf16>, vector<16x32xf32> -> vector<16x32xf32>
    %c0_25 = arith.constant 0 : index
    %c32 = arith.constant 32 : index
    %80 = vector.load %arg8[%c0_25, %c32] : memref<32x128xf32, #tpu.memory_space<vmem>>, vector<16x32xf32>
    tpu.vector_store %arg8[%c0_25, %c32], %79 {strides = array<i32>} : memref<32x128xf32, #tpu.memory_space<vmem>>, vector<16x32xf32>,
    %81 = vector.extract_strided_slice %32 {offsets = [0, 64], sizes = [16, 32], strides = [1, 1]} : vector<32x128xbf16> to vector<16x32xbf16>
    %82 = vector.extract_strided_slice %33 {offsets = [0, 32], sizes = [16, 32], strides = [1, 1]} : vector<32x64xbf16> to vector<16x32xbf16>
    %83 = vector.extract_strided_slice %34 {offsets = [0, 32], sizes = [16, 32], strides = [1, 1]} : vector<32x64xbf16> to vector<16x32xbf16>
    %cst_26 = arith.constant dense<0.000000e+00> : vector<16x16xf32>
    %84 = tpu.matmul %81, %82, %cst_26 {dimension_numbers = #tpu.dot_dimension_numbers<[1], [1], [0], [0], [0, 0, 1, 0], [], []>} : vector<16x32xbf16>, vector<16x32xbf16>, vector<16x16xf32> -> vector<16x16xf32>
    %cst_27 = arith.constant 0.176776692 : f32
    %85 = vector.broadcast %cst_27 : f32 to vector<16x16xf32>
    %86 = arith.mulf %84, %85 : vector<16x16xf32>
    %87 = arith.addf %86, %40 : vector<16x16xf32>
    %cst_28 = arith.constant dense<0xFF800000> : vector<16xf32>
    %88 = vector.multi_reduction <maximumf>, %87, %cst_28 [1] : vector<16x16xf32> to vector<16xf32>
    %89 = vector.shape_cast %88 : vector<16xf32> to vector<16x1xf32>
    %90 = vector.broadcast %89 : vector<16x1xf32> to vector<16x16xf32>
    %91 = arith.subf %87, %90 : vector<16x16xf32>
    %92 = math.exp %91 : vector<16x16xf32>
    %cst_29 = arith.constant dense<0.000000e+00> : vector<16xf32>
    %93 = vector.multi_reduction <add>, %92, %cst_29 [1] : vector<16x16xf32> to vector<16xf32>
    %94 = vector.shape_cast %93 : vector<16xf32> to vector<16x1xf32>
    %95 = tpu.reciprocal %94 {approx = true} : vector<16x1xf32> -> vector<16x1xf32>
    %96 = vector.broadcast %95 : vector<16x1xf32> to vector<16x16xf32>
    %97 = arith.mulf %92, %96 : vector<16x16xf32>
    %98 = arith.truncf %97 : vector<16x16xf32> to vector<16x16xbf16>
    %cst_30 = arith.constant dense<0.000000e+00> : vector<16x32xf32>
    %99 = tpu.matmul %98, %83, %cst_30 {dimension_numbers = #tpu.dot_dimension_numbers<[1], [0], [0], [1], [0, 0, 1, 1], [], []>} : vector<16x16xbf16>, vector<16x32xbf16>, vector<16x32xf32> -> vector<16x32xf32>
    %c0_31 = arith.constant 0 : index
    %c64 = arith.constant 64 : index
    %100 = vector.load %arg8[%c0_31, %c64] : memref<32x128xf32, #tpu.memory_space<vmem>>, vector<16x32xf32>
    tpu.vector_store %arg8[%c0_31, %c64], %99 {strides = array<i32>} : memref<32x128xf32, #tpu.memory_space<vmem>>, vector<16x32xf32>,
    %101 = vector.extract_strided_slice %32 {offsets = [0, 96], sizes = [16, 32], strides = [1, 1]} : vector<32x128xbf16> to vector<16x32xbf16>
    %102 = vector.extract_strided_slice %33 {offsets = [0, 32], sizes = [16, 32], strides = [1, 1]} : vector<32x64xbf16> to vector<16x32xbf16>
    %103 = vector.extract_strided_slice %34 {offsets = [0, 32], sizes = [16, 32], strides = [1, 1]} : vector<32x64xbf16> to vector<16x32xbf16>
    %cst_32 = arith.constant dense<0.000000e+00> : vector<16x16xf32>
    %104 = tpu.matmul %101, %102, %cst_32 {dimension_numbers = #tpu.dot_dimension_numbers<[1], [1], [0], [0], [0, 0, 1, 0], [], []>} : vector<16x32xbf16>, vector<16x32xbf16>, vector<16x16xf32> -> vector<16x16xf32>
    %cst_33 = arith.constant 0.176776692 : f32
    %105 = vector.broadcast %cst_33 : f32 to vector<16x16xf32>
    %106 = arith.mulf %104, %105 : vector<16x16xf32>
    %107 = arith.addf %106, %40 : vector<16x16xf32>
    %cst_34 = arith.constant dense<0xFF800000> : vector<16xf32>
    %108 = vector.multi_reduction <maximumf>, %107, %cst_34 [1] : vector<16x16xf32> to vector<16xf32>
    %109 = vector.shape_cast %108 : vector<16xf32> to vector<16x1xf32>
    %110 = vector.broadcast %109 : vector<16x1xf32> to vector<16x16xf32>
    %111 = arith.subf %107, %110 : vector<16x16xf32>
    %112 = math.exp %111 : vector<16x16xf32>
    %cst_35 = arith.constant dense<0.000000e+00> : vector<16xf32>
    %113 = vector.multi_reduction <add>, %112, %cst_35 [1] : vector<16x16xf32> to vector<16xf32>
    %114 = vector.shape_cast %113 : vector<16xf32> to vector<16x1xf32>
    %115 = tpu.reciprocal %114 {approx = true} : vector<16x1xf32> -> vector<16x1xf32>
    %116 = vector.broadcast %115 : vector<16x1xf32> to vector<16x16xf32>
    %117 = arith.mulf %112, %116 : vector<16x16xf32>
    %118 = arith.truncf %117 : vector<16x16xf32> to vector<16x16xbf16>
    %cst_36 = arith.constant dense<0.000000e+00> : vector<16x32xf32>
    %119 = tpu.matmul %118, %103, %cst_36 {dimension_numbers = #tpu.dot_dimension_numbers<[1], [0], [0], [1], [0, 0, 1, 1], [], []>} : vector<16x16xbf16>, vector<16x32xbf16>, vector<16x32xf32> -> vector<16x32xf32>
    %c0_37 = arith.constant 0 : index
    %c96 = arith.constant 96 : index
    %120 = vector.load %arg8[%c0_37, %c96] : memref<32x128xf32, #tpu.memory_space<vmem>>, vector<16x32xf32>
    tpu.vector_store %arg8[%c0_37, %c96], %119 {strides = array<i32>} : memref<32x128xf32, #tpu.memory_space<vmem>>, vector<16x32xf32>,
    %121 = vector.extract_strided_slice %32 {offsets = [16, 0], sizes = [16, 32], strides = [1, 1]} : vector<32x128xbf16> to vector<16x32xbf16>
    %122 = vector.extract_strided_slice %33 {offsets = [16, 0], sizes = [16, 32], strides = [1, 1]} : vector<32x64xbf16> to vector<16x32xbf16>
    %123 = vector.extract_strided_slice %34 {offsets = [16, 0], sizes = [16, 32], strides = [1, 1]} : vector<32x64xbf16> to vector<16x32xbf16>
    %cst_38 = arith.constant dense<0.000000e+00> : vector<16x16xf32>
    %124 = tpu.matmul %121, %122, %cst_38 {dimension_numbers = #tpu.dot_dimension_numbers<[1], [1], [0], [0], [0, 0, 1, 0], [], []>} : vector<16x32xbf16>, vector<16x32xbf16>, vector<16x16xf32> -> vector<16x16xf32>
    %cst_39 = arith.constant 0.176776692 : f32
    %125 = vector.broadcast %cst_39 : f32 to vector<16x16xf32>
    %126 = arith.mulf %124, %125 : vector<16x16xf32>
    %127 = arith.addf %126, %40 : vector<16x16xf32>
    %cst_40 = arith.constant dense<0xFF800000> : vector<16xf32>
    %128 = vector.multi_reduction <maximumf>, %127, %cst_40 [1] : vector<16x16xf32> to vector<16xf32>
    %129 = vector.shape_cast %128 : vector<16xf32> to vector<16x1xf32>
    %130 = vector.broadcast %129 : vector<16x1xf32> to vector<16x16xf32>
    %131 = arith.subf %127, %130 : vector<16x16xf32>
    %132 = math.exp %131 : vector<16x16xf32>
    %cst_41 = arith.constant dense<0.000000e+00> : vector<16xf32>
    %133 = vector.multi_reduction <add>, %132, %cst_41 [1] : vector<16x16xf32> to vector<16xf32>
    %134 = vector.shape_cast %133 : vector<16xf32> to vector<16x1xf32>
    %135 = tpu.reciprocal %134 {approx = true} : vector<16x1xf32> -> vector<16x1xf32>
    %136 = vector.broadcast %135 : vector<16x1xf32> to vector<16x16xf32>
    %137 = arith.mulf %132, %136 : vector<16x16xf32>
    %138 = arith.truncf %137 : vector<16x16xf32> to vector<16x16xbf16>
    %cst_42 = arith.constant dense<0.000000e+00> : vector<16x32xf32>
    %139 = tpu.matmul %138, %123, %cst_42 {dimension_numbers = #tpu.dot_dimension_numbers<[1], [0], [0], [1], [0, 0, 1, 1], [], []>} : vector<16x16xbf16>, vector<16x32xbf16>, vector<16x32xf32> -> vector<16x32xf32>
    %c16 = arith.constant 16 : index
    %c0_43 = arith.constant 0 : index
    %140 = vector.load %arg8[%c16, %c0_43] : memref<32x128xf32, #tpu.memory_space<vmem>>, vector<16x32xf32>
    tpu.vector_store %arg8[%c16, %c0_43], %139 {strides = array<i32>} : memref<32x128xf32, #tpu.memory_space<vmem>>, vector<16x32xf32>,
    %141 = vector.extract_strided_slice %32 {offsets = [16, 32], sizes = [16, 32], strides = [1, 1]} : vector<32x128xbf16> to vector<16x32xbf16>
    %142 = vector.extract_strided_slice %33 {offsets = [16, 0], sizes = [16, 32], strides = [1, 1]} : vector<32x64xbf16> to vector<16x32xbf16>
    %143 = vector.extract_strided_slice %34 {offsets = [16, 0], sizes = [16, 32], strides = [1, 1]} : vector<32x64xbf16> to vector<16x32xbf16>
    %cst_44 = arith.constant dense<0.000000e+00> : vector<16x16xf32>
    %144 = tpu.matmul %141, %142, %cst_44 {dimension_numbers = #tpu.dot_dimension_numbers<[1], [1], [0], [0], [0, 0, 1, 0], [], []>} : vector<16x32xbf16>, vector<16x32xbf16>, vector<16x16xf32> -> vector<16x16xf32>
    %cst_45 = arith.constant 0.176776692 : f32
    %145 = vector.broadcast %cst_45 : f32 to vector<16x16xf32>
    %146 = arith.mulf %144, %145 : vector<16x16xf32>
    %147 = arith.addf %146, %40 : vector<16x16xf32>
    %cst_46 = arith.constant dense<0xFF800000> : vector<16xf32>
    %148 = vector.multi_reduction <maximumf>, %147, %cst_46 [1] : vector<16x16xf32> to vector<16xf32>
    %149 = vector.shape_cast %148 : vector<16xf32> to vector<16x1xf32>
    %150 = vector.broadcast %149 : vector<16x1xf32> to vector<16x16xf32>
    %151 = arith.subf %147, %150 : vector<16x16xf32>
    %152 = math.exp %151 : vector<16x16xf32>
    %cst_47 = arith.constant dense<0.000000e+00> : vector<16xf32>
    %153 = vector.multi_reduction <add>, %152, %cst_47 [1] : vector<16x16xf32> to vector<16xf32>
    %154 = vector.shape_cast %153 : vector<16xf32> to vector<16x1xf32>
    %155 = tpu.reciprocal %154 {approx = true} : vector<16x1xf32> -> vector<16x1xf32>
    %156 = vector.broadcast %155 : vector<16x1xf32> to vector<16x16xf32>
    %157 = arith.mulf %152, %156 : vector<16x16xf32>
    %158 = arith.truncf %157 : vector<16x16xf32> to vector<16x16xbf16>
    %cst_48 = arith.constant dense<0.000000e+00> : vector<16x32xf32>
    %159 = tpu.matmul %158, %143, %cst_48 {dimension_numbers = #tpu.dot_dimension_numbers<[1], [0], [0], [1], [0, 0, 1, 1], [], []>} : vector<16x16xbf16>, vector<16x32xbf16>, vector<16x32xf32> -> vector<16x32xf32>
    %c16_49 = arith.constant 16 : index
    %c32_50 = arith.constant 32 : index
    %160 = vector.load %arg8[%c16_49, %c32_50] : memref<32x128xf32, #tpu.memory_space<vmem>>, vector<16x32xf32>
    tpu.vector_store %arg8[%c16_49, %c32_50], %159 {strides = array<i32>} : memref<32x128xf32, #tpu.memory_space<vmem>>, vector<16x32xf32>,
    %161 = vector.extract_strided_slice %32 {offsets = [16, 64], sizes = [16, 32], strides = [1, 1]} : vector<32x128xbf16> to vector<16x32xbf16>
    %162 = vector.extract_strided_slice %33 {offsets = [16, 32], sizes = [16, 32], strides = [1, 1]} : vector<32x64xbf16> to vector<16x32xbf16>
    %163 = vector.extract_strided_slice %34 {offsets = [16, 32], sizes = [16, 32], strides = [1, 1]} : vector<32x64xbf16> to vector<16x32xbf16>
    %cst_51 = arith.constant dense<0.000000e+00> : vector<16x16xf32>
    %164 = tpu.matmul %161, %162, %cst_51 {dimension_numbers = #tpu.dot_dimension_numbers<[1], [1], [0], [0], [0, 0, 1, 0], [], []>} : vector<16x32xbf16>, vector<16x32xbf16>, vector<16x16xf32> -> vector<16x16xf32>
    %cst_52 = arith.constant 0.176776692 : f32
    %165 = vector.broadcast %cst_52 : f32 to vector<16x16xf32>
    %166 = arith.mulf %164, %165 : vector<16x16xf32>
    %167 = arith.addf %166, %40 : vector<16x16xf32>
    %cst_53 = arith.constant dense<0xFF800000> : vector<16xf32>
    %168 = vector.multi_reduction <maximumf>, %167, %cst_53 [1] : vector<16x16xf32> to vector<16xf32>
    %169 = vector.shape_cast %168 : vector<16xf32> to vector<16x1xf32>
    %170 = vector.broadcast %169 : vector<16x1xf32> to vector<16x16xf32>
    %171 = arith.subf %167, %170 : vector<16x16xf32>
    %172 = math.exp %171 : vector<16x16xf32>
    %cst_54 = arith.constant dense<0.000000e+00> : vector<16xf32>
    %173 = vector.multi_reduction <add>, %172, %cst_54 [1] : vector<16x16xf32> to vector<16xf32>
    %174 = vector.shape_cast %173 : vector<16xf32> to vector<16x1xf32>
    %175 = tpu.reciprocal %174 {approx = true} : vector<16x1xf32> -> vector<16x1xf32>
    %176 = vector.broadcast %175 : vector<16x1xf32> to vector<16x16xf32>
    %177 = arith.mulf %172, %176 : vector<16x16xf32>
    %178 = arith.truncf %177 : vector<16x16xf32> to vector<16x16xbf16>
    %cst_55 = arith.constant dense<0.000000e+00> : vector<16x32xf32>
    %179 = tpu.matmul %178, %163, %cst_55 {dimension_numbers = #tpu.dot_dimension_numbers<[1], [0], [0], [1], [0, 0, 1, 1], [], []>} : vector<16x16xbf16>, vector<16x32xbf16>, vector<16x32xf32> -> vector<16x32xf32>
    %c16_56 = arith.constant 16 : index
    %c64_57 = arith.constant 64 : index
    %180 = vector.load %arg8[%c16_56, %c64_57] : memref<32x128xf32, #tpu.memory_space<vmem>>, vector<16x32xf32>
    tpu.vector_store %arg8[%c16_56, %c64_57], %179 {strides = array<i32>} : memref<32x128xf32, #tpu.memory_space<vmem>>, vector<16x32xf32>,
    %181 = vector.extract_strided_slice %32 {offsets = [16, 96], sizes = [16, 32], strides = [1, 1]} : vector<32x128xbf16> to vector<16x32xbf16>
    %182 = vector.extract_strided_slice %33 {offsets = [16, 32], sizes = [16, 32], strides = [1, 1]} : vector<32x64xbf16> to vector<16x32xbf16>
    %183 = vector.extract_strided_slice %34 {offsets = [16, 32], sizes = [16, 32], strides = [1, 1]} : vector<32x64xbf16> to vector<16x32xbf16>
    %cst_58 = arith.constant dense<0.000000e+00> : vector<16x16xf32>
    %184 = tpu.matmul %181, %182, %cst_58 {dimension_numbers = #tpu.dot_dimension_numbers<[1], [1], [0], [0], [0, 0, 1, 0], [], []>} : vector<16x32xbf16>, vector<16x32xbf16>, vector<16x16xf32> -> vector<16x16xf32>
    %cst_59 = arith.constant 0.176776692 : f32
    %185 = vector.broadcast %cst_59 : f32 to vector<16x16xf32>
    %186 = arith.mulf %184, %185 : vector<16x16xf32>
    %187 = arith.addf %186, %40 : vector<16x16xf32>
    %cst_60 = arith.constant dense<0xFF800000> : vector<16xf32>
    %188 = vector.multi_reduction <maximumf>, %187, %cst_60 [1] : vector<16x16xf32> to vector<16xf32>
    %189 = vector.shape_cast %188 : vector<16xf32> to vector<16x1xf32>
    %190 = vector.broadcast %189 : vector<16x1xf32> to vector<16x16xf32>
    %191 = arith.subf %187, %190 : vector<16x16xf32>
    %192 = math.exp %191 : vector<16x16xf32>
    %cst_61 = arith.constant dense<0.000000e+00> : vector<16xf32>
    %193 = vector.multi_reduction <add>, %192, %cst_61 [1] : vector<16x16xf32> to vector<16xf32>
    %194 = vector.shape_cast %193 : vector<16xf32> to vector<16x1xf32>
    %195 = tpu.reciprocal %194 {approx = true} : vector<16x1xf32> -> vector<16x1xf32>
    %196 = vector.broadcast %195 : vector<16x1xf32> to vector<16x16xf32>
    %197 = arith.mulf %192, %196 : vector<16x16xf32>
    %198 = arith.truncf %197 : vector<16x16xf32> to vector<16x16xbf16>
    %cst_62 = arith.constant dense<0.000000e+00> : vector<16x32xf32>
    %199 = tpu.matmul %198, %183, %cst_62 {dimension_numbers = #tpu.dot_dimension_numbers<[1], [0], [0], [1], [0, 0, 1, 1], [], []>} : vector<16x16xbf16>, vector<16x32xbf16>, vector<16x32xf32> -> vector<16x32xf32>
    %c16_63 = arith.constant 16 : index
    %c96_64 = arith.constant 96 : index
    %200 = vector.load %arg8[%c16_63, %c96_64] : memref<32x128xf32, #tpu.memory_space<vmem>>, vector<16x32xf32>
    tpu.vector_store %arg8[%c16_63, %c96_64], %199 {strides = array<i32>} : memref<32x128xf32, #tpu.memory_space<vmem>>, vector<16x32xf32>,
    %c0_65 = arith.constant 0 : index
    %c0_66 = arith.constant 0 : index
    %201 = vector.load %arg8[%c0_65, %c0_66] : memref<32x128xf32, #tpu.memory_space<vmem>>, vector<32x128xf32>
    %202 = arith.truncf %201 : vector<32x128xf32> to vector<32x128xbf16>
    %c0_67 = arith.constant 0 : index
    %c0_68 = arith.constant 0 : index
    %203 = vector.load %arg2[%c0_67, %c0_68] : memref<128x128xbf16, #tpu.memory_space<vmem>>, vector<128x128xbf16>
    %cst_69 = arith.constant dense<0.000000e+00> : vector<32x128xf32>
    %204 = tpu.matmul %202, %203, %cst_69 {dimension_numbers = #tpu.dot_dimension_numbers<[1], [0], [0], [1], [0, 0, 1, 1], [], []>} : vector<32x128xbf16>, vector<128x128xbf16>, vector<32x128xf32> -> vector<32x128xf32>
    %205 = arith.addf %0, %204 : vector<32x128xf32>
    %c1 = arith.constant 1 : index
    %c0_70 = arith.constant 0 : index
    %206 = vector.load %arg5[%c1, %c0_70] : memref<2x128xf32, #tpu.memory_space<vmem>>, vector<1x128xf32>
    %207 = arith.mulf %205, %205 : vector<32x128xf32>
    %cst_71 = arith.constant dense<0.000000e+00> : vector<32xf32>
    %208 = vector.multi_reduction <add>, %207, %cst_71 [1] : vector<32x128xf32> to vector<32xf32>
    %209 = vector.shape_cast %208 : vector<32xf32> to vector<32x1xf32>
    %cst_72 = arith.constant 1.280000e+02 : f32
    %210 = vector.broadcast %cst_72 : f32 to vector<32x1xf32>
    %211 = arith.divf %209, %210 : vector<32x1xf32>
    %cst_73 = arith.constant 9.99999974E-6 : f32
    %212 = vector.broadcast %cst_73 : f32 to vector<32x1xf32>
    %213 = arith.addf %211, %212 : vector<32x1xf32>
    %214 = math.rsqrt %213 : vector<32x1xf32>
    %215 = vector.broadcast %214 : vector<32x1xf32> to vector<32x128xf32>
    %216 = arith.mulf %205, %215 : vector<32x128xf32>
    %217 = vector.broadcast %206 : vector<1x128xf32> to vector<32x128xf32>
    %218 = arith.mulf %217, %216 : vector<32x128xf32>
    %219 = arith.truncf %218 : vector<32x128xf32> to vector<32x128xbf16>
    %c0_74 = arith.constant 0 : index
    %c0_75 = arith.constant 0 : index
    %220 = vector.load %arg3[%c0_74, %c0_75] : memref<128x768xbf16, #tpu.memory_space<vmem>>, vector<128x768xbf16>
    %cst_76 = arith.constant dense<0.000000e+00> : vector<32x768xf32>
    %221 = tpu.matmul %219, %220, %cst_76 {dimension_numbers = #tpu.dot_dimension_numbers<[1], [0], [0], [1], [0, 0, 1, 1], [], []>} : vector<32x128xbf16>, vector<128x768xbf16>, vector<32x768xf32> -> vector<32x768xf32>
    %222 = vector.extract_strided_slice %221 {offsets = [0, 0], sizes = [32, 384], strides = [1, 1]} : vector<32x768xf32> to vector<32x384xf32>
    %223 = vector.extract_strided_slice %221 {offsets = [0, 384], sizes = [32, 384], strides = [1, 1]} : vector<32x768xf32> to vector<32x384xf32>
    %224 = arith.mulf %222, %223 : vector<32x384xf32>
    %225 = arith.negf %224 : vector<32x384xf32>
    %226 = math.exp %225 : vector<32x384xf32>
    %cst_77 = arith.constant 1.000000e+00 : f32
    %227 = vector.broadcast %cst_77 : f32 to vector<32x384xf32>
    %228 = arith.addf %227, %226 : vector<32x384xf32>
    %229 = arith.divf %227, %228 : vector<32x384xf32>
    %230 = arith.mulf %224, %229 : vector<32x384xf32>
    %231 = arith.truncf %230 : vector<32x384xf32> to vector<32x384xbf16>
    %c0_78 = arith.constant 0 : index
    %c0_79 = arith.constant 0 : index
    %232 = vector.load %arg4[%c0_78, %c0_79] : memref<384x128xbf16, #tpu.memory_space<vmem>>, vector<384x128xbf16>
    %cst_80 = arith.constant dense<0.000000e+00> : vector<32x128xf32>
    %233 = tpu.matmul %231, %232, %cst_80 {dimension_numbers = #tpu.dot_dimension_numbers<[1], [0], [0], [1], [0, 0, 1, 1], [], []>} : vector<32x384xbf16>, vector<384x128xbf16>, vector<32x128xf32> -> vector<32x128xf32>
    %234 = arith.addf %205, %233 : vector<32x128xf32>
    %c0_81 = arith.constant 0 : index
    %c0_82 = arith.constant 0 : index
    %235 = vector.load %arg7[%c0_81, %c0_82] : memref<32x128xf32, #tpu.memory_space<vmem>>, vector<32x128xf32>
    tpu.vector_store %arg7[%c0_81, %c0_82], %234 {strides = array<i32>} : memref<32x128xf32, #tpu.memory_space<vmem>>, vector<32x128xf32>,
    return
  }
}

</mosaic_0001>

<llo_original>
// kernel: tpu_custom_call.1
$region0: #{tpu_custom_call.1}
  #allocation0 [shape = 'u32[]', space=smem, size = 0x4, offset = 0x4, fixed_abs, tag = 'smem constant byte address 0x4 - core index']
  #allocation1 [shape = 'u32[144,128]{1,0:T(1,128)}', space=vmem, size = 0x12000, scoped, tag = 'internal scratch']
  #allocation2 [shape = 'f32[32,128]{1,0:T(8,128)}', space=vmem, size = 0x4000, scoped, tag = 'scratch operand']
  %s0 = inlined_call_operand.vmem [shape: f32[32,128], index: 0, kind: input, shape index: {}]
  %s1 = inlined_call_operand.vmem [shape: bf16[128,448], index: 1, kind: input, shape index: {}]
  %s2 = inlined_call_operand.vmem [shape: bf16[128,128], index: 2, kind: input, shape index: {}]
  %s3 = inlined_call_operand.vmem [shape: bf16[128,768], index: 3, kind: input, shape index: {}]
  %s4 = inlined_call_operand.hbm [shape: bf16[384,128], index: 4, kind: input, shape index: {}]
  %s5 = inlined_call_operand.vmem [shape: f32[2,128], index: 5, kind: input, shape index: {}]
  %s6 = inlined_call_operand.hbm [shape: f32[32,256], index: 6, kind: input, shape index: {}]
  %s7 = inlined_call_operand.hbm [shape: f32[32,128], index: 7, kind: output, shape index: {}]
  %s8 = sld [smem:[#allocation0]]
  $region46: #{tpu_custom_call.1} parent=0
    _
  %s10 = ssub.s32 1, %s8
  %s11 = scalar_select 0, %s10, %s8
  $region1: #{tpu_custom_call.1} parent=0
    #allocation3 [shape = 'u8[98304]{0}', space=vmem, size = 0x18000, scoped, tag = 'input window, operand 4, single buffered']
    #allocation4 [shape = 's32[1]{0}', space=sflag, size = 0x4, scoped, tag = 'scoped memory for tpu_custom_call.1']
    #allocation5 [shape = 's32[1]{0}', space=sflag, size = 0x4, scoped, tag = 'scoped memory for tpu_custom_call.1']
    #allocation6 [shape = 'u8[32768]{0}', space=vmem, size = 0x8000, scoped, tag = 'input window, operand 6, single buffered']
    #allocation7 [shape = 's32[1]{0}', space=sflag, size = 0x4, scoped, tag = 'scoped memory for tpu_custom_call.1']
    #allocation8 [shape = 'u8[16384]{0}', space=vmem, size = 0x4000, scoped, tag = 'output window, operand 0, single buffered']
    %12 = vsyncpa [#allocation4], 0
    %13 = vsyncpa [#allocation7], 0
    %14 = vsyncpa [#allocation5], 0
    // Predicated region
    $region2: #{tpu_custom_call.1} parent=1 // pred_check
      _
    $region3: #{tpu_custom_call.1} parent=1 // pred_check_branch
      %16 = sbr.rel (0) target = $region5
    $region4: #{tpu_custom_call.1} parent=1 // pred_region
      _
    $region5: #{tpu_custom_call.1} parent=1 // pred_fallthru
      _
    // Predicated region
    $region6: #{tpu_custom_call.1} parent=1 // pred_check
      _
    $region7: #{tpu_custom_call.1} parent=1 // pred_check_branch
      %18 = sbr.rel (0) target = $region9
    $region8: #{tpu_custom_call.1} parent=1 // pred_region
      _
    $region9: #{tpu_custom_call.1} parent=1 // pred_fallthru
      _
    // Predicated region
    $region10: #{tpu_custom_call.1} parent=1 // pred_check
      _
    $region11: #{tpu_custom_call.1} parent=1 // pred_check_branch
      %20 = sbr.rel (0) target = $region13
    $region12: #{tpu_custom_call.1} parent=1 // pred_region
      _
    $region13: #{tpu_custom_call.1} parent=1 // pred_fallthru
      _
    // Predicated region
    $region14: #{tpu_custom_call.1} parent=1 // pred_check
      _
    $region15: #{tpu_custom_call.1} parent=1 // pred_check_branch
      %22 = sbr.rel (0) target = $region17
    $region16: #{tpu_custom_call.1} parent=1 // pred_region
      _
    $region17: #{tpu_custom_call.1} parent=1 // pred_fallthru
      _
    // Predicated region
    $region18: #{tpu_custom_call.1} parent=1 // pred_check
      _
    $region19: #{tpu_custom_call.1} parent=1 // pred_check_branch
      %24 = sbr.rel (0) target = $region21
    $region20: #{tpu_custom_call.1} parent=1 // pred_region
      %s26 = ssub.s32 3072, 3072
      %27 = vsyncadd [#allocation4], %s26
      %s28 = sshll.u32 [#allocation3], 4
      %s29 = int_to_ptr.vmem [resolvable:$true] %s28
      %34 = dma.hbm_to_vmem [thread:$0]  %s4, 3072, %s29, [#allocation4], 64, 64, 4
    $region21: #{tpu_custom_call.1} parent=1 // pred_fallthru
      _
    // Predicated region
    $region22: #{tpu_custom_call.1} parent=1 // pred_check
      _
    $region23: #{tpu_custom_call.1} parent=1 // pred_check_branch
      %36 = sbr.rel (0) target = $region25
    $region24: #{tpu_custom_call.1} parent=1 // pred_region
      _
    $region25: #{tpu_custom_call.1} parent=1 // pred_fallthru
      _
    // Predicated region
    $region26: #{tpu_custom_call.1} parent=1 // pred_check
      _
    $region27: #{tpu_custom_call.1} parent=1 // pred_check_branch
      %38 = sbr.rel (0) target = $region29
    $region28: #{tpu_custom_call.1} parent=1 // pred_region
      %s40 = ssub.s32 1024, 1024
      %41 = vsyncadd [#allocation7], %s40
      %s42 = sshll.u32 [#allocation6], 4
      %s43 = int_to_ptr.vmem [resolvable:$true] %s42
      %48 = dma.hbm_to_vmem [thread:$0]  %s6, 1024, %s43, [#allocation7], 256, 256, 16
    $region29: #{tpu_custom_call.1} parent=1 // pred_fallthru
      _
    // Predicated region
    $region30: #{tpu_custom_call.1} parent=1 // pred_check
      _
    $region31: #{tpu_custom_call.1} parent=1 // pred_check_branch
      %50 = sbr.rel (0) target = $region33
    $region32: #{tpu_custom_call.1} parent=1 // pred_region
      %51 = dma.done [#allocation4], 3072
    $region33: #{tpu_custom_call.1} parent=1 // pred_fallthru
      _
    // Predicated region
    $region34: #{tpu_custom_call.1} parent=1 // pred_check
      _
    $region35: #{tpu_custom_call.1} parent=1 // pred_check_branch
      %53 = sbr.rel (0) target = $region37
    $region36: #{tpu_custom_call.1} parent=1 // pred_region
      %54 = dma.done [#allocation7], 1024
    $region37: #{tpu_custom_call.1} parent=1 // pred_fallthru
      _
    %v56 = vld [vmem:[%s0] sm:$0xff]
    %v57 = vld [vmem:[%s0 + $0x8] sm:$0xff]
    %v58 = vld [vmem:[%s0 + $0x10] sm:$0xff]
    %v59 = vld [vmem:[%s0 + $0x18] sm:$0xff]
    %v60 = vld [vmem:[%s5] sm:$0x1]
    %v61 = vmul.f32 %v56, %v56
    %v62 = vmul.f32 %v57, %v57
    %v63 = vmul.f32 %v58, %v58
    %v64 = vmul.f32 %v59, %v59
    %65 = vadd.xlane.f32.xlu0 %v61
    %v66 = vpop.xlane.xlu0 %65
    %67 = vadd.xlane.f32.xlu0 %v62
    %v68 = vpop.xlane.xlu0 %67
    %69 = vadd.xlane.f32.xlu0 %v63
    %v70 = vpop.xlane.xlu0 %69
    %71 = vadd.xlane.f32.xlu0 %v64
    %v72 = vpop.xlane.xlu0 %71
    %v73 = vrcp.pop 128.0
    %v74 = vmul.f32 %v66, %v73
    %v75 = vmul.f32 %v68, %v73
    %v76 = vmul.f32 %v70, %v73
    %v77 = vmul.f32 %v72, %v73
    %v78 = vadd.f32 %v74, 1e-05
    %v79 = vadd.f32 %v75, 1e-05
    %v80 = vadd.f32 %v76, 1e-05
    %v81 = vadd.f32 %v77, 1e-05
    %v82 = vrsqrt.pop %v78
    %v83 = vrsqrt.pop %v79
    %v84 = vrsqrt.pop %v80
    %v85 = vrsqrt.pop %v81
    %v86 = vmul.f32 %v56, %v82
    %v87 = vmul.f32 %v57, %v83
    %v88 = vmul.f32 %v58, %v84
    %v89 = vmul.f32 %v59, %v85
    %v90 = vlaneseq
    %v91 = vshrl.u32 %v90, 7
    %v92 = vsub.s32 0, %v91
    %v93 = vrot.slane %v60, %v92
    %v94 = vmul.f32 %v93, %v86
    %v95 = vmul.f32 %v93, %v87
    %v96 = vmul.f32 %v93, %v88
    %v97 = vmul.f32 %v93, %v89
    %v98 = vpack.c.bf16 %v95, %v94
    %v99 = vpack.c.bf16 %v97, %v96
    %v100 = vld [vmem:[%s1] sm:$0xff]
    %v101 = vld [vmem:[%s1 + $0x8] sm:$0xff]
    %v102 = vld [vmem:[%s1 + $0x10] sm:$0xff]
    %v103 = vld [vmem:[%s1 + $0x18] sm:$0xff]
    %v104 = vld [vmem:[%s1 + $0x20] sm:$0xff]
    %v105 = vld [vmem:[%s1 + $0x28] sm:$0xff]
    %v106 = vld [vmem:[%s1 + $0x30] sm:$0xff]
    %v107 = vld [vmem:[%s1 + $0x38] sm:$0xff]
    %v108 = vld [vmem:[%s1 + $0x40] sm:$0xff]
    %v109 = vld [vmem:[%s1 + $0x48] sm:$0xff]
    %v110 = vld [vmem:[%s1 + $0x50] sm:$0xff]
    %v111 = vld [vmem:[%s1 + $0x58] sm:$0xff]
    %v112 = vld [vmem:[%s1 + $0x60] sm:$0xff]
    %v113 = vld [vmem:[%s1 + $0x68] sm:$0xff]
    %v114 = vld [vmem:[%s1 + $0x70] sm:$0xff]
    %v115 = vld [vmem:[%s1 + $0x78] sm:$0xff]
    %v116 = vld [vmem:[%s1 + $0x80] sm:$0xff]
    %v117 = vld [vmem:[%s1 + $0x88] sm:$0xff]
    %v118 = vld [vmem:[%s1 + $0x90] sm:$0xff]
    %v119 = vld [vmem:[%s1 + $0x98] sm:$0xff]
    %v120 = vld [vmem:[%s1 + $0xa0] sm:$0xff]
    %v121 = vld [vmem:[%s1 + $0xa8] sm:$0xff]
    %v122 = vld [vmem:[%s1 + $0xb0] sm:$0xff]
    %v123 = vld [vmem:[%s1 + $0xb8] sm:$0xff]
    %v124 = vld [vmem:[%s1 + $0xc0] sm:$0xff]
    %v125 = vld [vmem:[%s1 + $0xc8] sm:$0xff]
    %v126 = vld [vmem:[%s1 + $0xd0] sm:$0xff]
    %v127 = vld [vmem:[%s1 + $0xd8] sm:$0xff]
    %v128 = vld [vmem:[%s1 + $0xe0] sm:$0xff]
    %v129 = vld [vmem:[%s1 + $0xe8] sm:$0xff]
    %v130 = vld [vmem:[%s1 + $0xf0] sm:$0xff]
    %v131 = vld [vmem:[%s1 + $0xf8] sm:$0xff]
    %v164 = vunpack.c.l.b16 %v100
    %v165 = vunpack.c.h.b16 %v100
    %v166 = vunpack.c.l.b16 %v101
    %v167 = vunpack.c.h.b16 %v101
    %v168 = vunpack.c.l.b16 %v102
    %v169 = vunpack.c.h.b16 %v102
    %v170 = vunpack.c.l.b16 %v103
    %v171 = vunpack.c.h.b16 %v103
    %v172 = vunpack.c.l.b16 %v104
    %v173 = vunpack.c.h.b16 %v104
    %v174 = vunpack.c.l.b16 %v105
    %v175 = vunpack.c.h.b16 %v105
    %v176 = vunpack.c.l.b16 %v106
    %v177 = vunpack.c.h.b16 %v106
    %v178 = vunpack.c.l.b16 %v107
    %v179 = vunpack.c.h.b16 %v107
    %v180 = vunpack.c.l.b16 %v108
    %v181 = vunpack.c.h.b16 %v108
    %v182 = vunpack.c.l.b16 %v109
    %v183 = vunpack.c.h.b16 %v109
    %v184 = vunpack.c.l.b16 %v110
    %v185 = vunpack.c.h.b16 %v110
    %v186 = vunpack.c.l.b16 %v111
    %v187 = vunpack.c.h.b16 %v111
    %v188 = vunpack.c.l.b16 %v112
    %v189 = vunpack.c.h.b16 %v112
    %v190 = vunpack.c.l.b16 %v113
    %v191 = vunpack.c.h.b16 %v113
    %v192 = vunpack.c.l.b16 %v114
    %v193 = vunpack.c.h.b16 %v114
    %v194 = vunpack.c.l.b16 %v115
    %v195 = vunpack.c.h.b16 %v115
    %v196 = vunpack.c.l.b16 %v116
    %v197 = vunpack.c.h.b16 %v116
    %v198 = vunpack.c.l.b16 %v117
    %v199 = vunpack.c.h.b16 %v117
    %v200 = vunpack.c.l.b16 %v118
    %v201 = vunpack.c.h.b16 %v118
    %v202 = vunpack.c.l.b16 %v119
    %v203 = vunpack.c.h.b16 %v119
    %v204 = vunpack.c.l.b16 %v120
    %v205 = vunpack.c.h.b16 %v120
    %v206 = vunpack.c.l.b16 %v121
    %v207 = vunpack.c.h.b16 %v121
    %v208 = vunpack.c.l.b16 %v122
    %v209 = vunpack.c.h.b16 %v122
    %v210 = vunpack.c.l.b16 %v123
    %v211 = vunpack.c.h.b16 %v123
    %v212 = vunpack.c.l.b16 %v124
    %v213 = vunpack.c.h.b16 %v124
    %v214 = vunpack.c.l.b16 %v125
    %v215 = vunpack.c.h.b16 %v125
    %v216 = vunpack.c.l.b16 %v126
    %v217 = vunpack.c.h.b16 %v126
    %v218 = vunpack.c.l.b16 %v127
    %v219 = vunpack.c.h.b16 %v127
    %v220 = vunpack.c.l.b16 %v128
    %v221 = vunpack.c.h.b16 %v128
    %v222 = vunpack.c.l.b16 %v129
    %v223 = vunpack.c.h.b16 %v129
    %v224 = vunpack.c.l.b16 %v130
    %v225 = vunpack.c.h.b16 %v130
    %v226 = vunpack.c.l.b16 %v131
    %v227 = vunpack.c.h.b16 %v131
    %v228 = vpack.c.b16 %v168, %v164
    %v229 = vpack.c.b16 %v169, %v165
    %v230 = vpack.c.b16 %v170, %v166
    %v231 = vpack.c.b16 %v171, %v167
    %v232 = vpack.c.b16 %v176, %v172
    %v233 = vpack.c.b16 %v177, %v173
    %v234 = vpack.c.b16 %v178, %v174
    %v235 = vpack.c.b16 %v179, %v175
    %v236 = vpack.c.b16 %v184, %v180
    %v237 = vpack.c.b16 %v185, %v181
    %v238 = vpack.c.b16 %v186, %v182
    %v239 = vpack.c.b16 %v187, %v183
    %v240 = vpack.c.b16 %v192, %v188
    %v241 = vpack.c.b16 %v193, %v189
    %v242 = vpack.c.b16 %v194, %v190
    %v243 = vpack.c.b16 %v195, %v191
    %v244 = vpack.c.b16 %v200, %v196
    %v245 = vpack.c.b16 %v201, %v197
    %v246 = vpack.c.b16 %v202, %v198
    %v247 = vpack.c.b16 %v203, %v199
    %v248 = vpack.c.b16 %v208, %v204
    %v249 = vpack.c.b16 %v209, %v205
    %v250 = vpack.c.b16 %v210, %v206
    %v251 = vpack.c.b16 %v211, %v207
    %v252 = vpack.c.b16 %v216, %v212
    %v253 = vpack.c.b16 %v217, %v213
    %v254 = vpack.c.b16 %v218, %v214
    %v255 = vpack.c.b16 %v219, %v215
    %v256 = vpack.c.b16 %v224, %v220
    %v257 = vpack.c.b16 %v225, %v221
    %v258 = vpack.c.b16 %v226, %v222
    %v259 = vpack.c.b16 %v227, %v223
    %292 = vmatprep.subr.bf16.mxu0 %v229
    %293 = vmatpush1.bf16.msra.mxu0 %v228
    %294 = vmatprep.subr.bf16.mxu0 %v233
    %295 = vmatpush1.bf16.msra.mxu0 %v232
    %296 = vmatprep.subr.bf16.mxu0 %v237
    %297 = vmatpush1.bf16.msra.mxu0 %v236
    %298 = vmatprep.subr.bf16.mxu0 %v241
    %299 = vmatpush1.bf16.msra.mxu0 %v240
    %300 = vmatprep.subr.bf16.mxu0 %v245
    %301 = vmatpush1.bf16.msra.mxu0 %v244
    %302 = vmatprep.subr.bf16.mxu0 %v249
    %303 = vmatpush1.bf16.msra.mxu0 %v248
    %304 = vmatprep.subr.bf16.mxu0 %v253
    %305 = vmatpush1.bf16.msra.mxu0 %v252
    %306 = vmatprep.subr.bf16.mxu0 %v257
    %307 = vmatpush1.bf16.msra.mxu0 %v256
    %308 = vmatprep.subr.bf16.mxu0 0
    %309 = vmatpush1.bf16.msra.mxu0 0
    %310 = vmatprep.subr.bf16.mxu0 0
    %311 = vmatpush1.bf16.msra.mxu0 0
    %312 = vmatprep.subr.bf16.mxu0 0
    %313 = vmatpush1.bf16.msra.mxu0 0
    %314 = vmatprep.subr.bf16.mxu0 0
    %315 = vmatpush1.bf16.msra.mxu0 0
    %316 = vmatprep.subr.bf16.mxu0 0
    %317 = vmatpush1.bf16.msra.mxu0 0
    %318 = vmatprep.subr.bf16.mxu0 0
    %319 = vmatpush1.bf16.msra.mxu0 0
    %320 = vmatprep.subr.bf16.mxu0 0
    %321 = vmatpush1.bf16.msra.mxu0 0
    %322 = vmatprep.subr.bf16.mxu0 0
    %323 = vmatpush1.bf16.msra.mxu0 0
    %324 = vmatprep.mubr.bf16.mxu0 0
    %325 = vmatmul.mubr.bf16.gmra.mrb[0].mxu0 %v98
    %v326 = vpop.f32.mrb[0].mxu0
    %v327 = vadd.f32 0.0, %v326
    %v328 = vpop.f32.mrb[0].mxu0
    %v329 = vadd.f32 0.0, %v328
    %v330 = vpop.f32.mrb[0].mxu0
    %v331 = vadd.f32 0.0, %v330
    %v332 = vpop.f32.mrb[0].mxu0
    %v333 = vadd.f32 0.0, %v332
    %334 = vmatprep.mubr.bf16.mxu0 0
    %335 = vmatmul.mubr.bf16.gmra.mrb[0].mxu0 %v99
    %v336 = vpop.f32.mrb[0].mxu0
    %v337 = vadd.f32 0.0, %v336
    %v338 = vpop.f32.mrb[0].mxu0
    %v339 = vadd.f32 0.0, %v338
    %v340 = vpop.f32.mrb[0].mxu0
    %v341 = vadd.f32 0.0, %v340
    %v342 = vpop.f32.mrb[0].mxu0
    %v343 = vadd.f32 0.0, %v342
    %344 = vdwg.mxu0
    %345 = vmatprep.subr.bf16.mxu0 %v231
    %346 = vmatpush1.bf16.msra.mxu0 %v230
    %347 = vmatprep.subr.bf16.mxu0 %v235
    %348 = vmatpush1.bf16.msra.mxu0 %v234
    %349 = vmatprep.subr.bf16.mxu0 %v239
    %350 = vmatpush1.bf16.msra.mxu0 %v238
    %351 = vmatprep.subr.bf16.mxu0 %v243
    %352 = vmatpush1.bf16.msra.mxu0 %v242
    %353 = vmatprep.subr.bf16.mxu0 %v247
    %354 = vmatpush1.bf16.msra.mxu0 %v246
    %355 = vmatprep.subr.bf16.mxu0 %v251
    %356 = vmatpush1.bf16.msra.mxu0 %v250
    %357 = vmatprep.subr.bf16.mxu0 %v255
    %358 = vmatpush1.bf16.msra.mxu0 %v254
    %359 = vmatprep.subr.bf16.mxu0 %v259
    %360 = vmatpush1.bf16.msra.mxu0 %v258
    %361 = vmatprep.subr.bf16.mxu0 0
    %362 = vmatpush1.bf16.msra.mxu0 0
    %363 = vmatprep.subr.bf16.mxu0 0
    %364 = vmatpush1.bf16.msra.mxu0 0
    %365 = vmatprep.subr.bf16.mxu0 0
    %366 = vmatpush1.bf16.msra.mxu0 0
    %367 = vmatprep.subr.bf16.mxu0 0
    %368 = vmatpush1.bf16.msra.mxu0 0
    %369 = vmatprep.subr.bf16.mxu0 0
    %370 = vmatpush1.bf16.msra.mxu0 0
    %371 = vmatprep.subr.bf16.mxu0 0
    %372 = vmatpush1.bf16.msra.mxu0 0
    %373 = vmatprep.subr.bf16.mxu0 0
    %374 = vmatpush1.bf16.msra.mxu0 0
    %375 = vmatprep.subr.bf16.mxu0 0
    %376 = vmatpush1.bf16.msra.mxu0 0
    %377 = vmatprep.mubr.bf16.mxu0 0
    %378 = vmatmul.mubr.bf16.gmra.mrb[0].mxu0 %v98
    %v379 = vpop.f32.mrb[0].mxu0
    %v380 = vadd.f32 0.0, %v379
    %v381 = vpop.f32.mrb[0].mxu0
    %v382 = vadd.f32 0.0, %v381
    %v383 = vpop.f32.mrb[0].mxu0
    %v384 = vadd.f32 0.0, %v383
    %v385 = vpop.f32.mrb[0].mxu0
    %v386 = vadd.f32 0.0, %v385
    %387 = vmatprep.mubr.bf16.mxu0 0
    %388 = vmatmul.mubr.bf16.gmra.mrb[0].mxu0 %v99
    %v389 = vpop.f32.mrb[0].mxu0
    %v390 = vadd.f32 0.0, %v389
    %v391 = vpop.f32.mrb[0].mxu0
    %v392 = vadd.f32 0.0, %v391
    %v393 = vpop.f32.mrb[0].mxu0
    %v394 = vadd.f32 0.0, %v393
    %v395 = vpop.f32.mrb[0].mxu0
    %v396 = vadd.f32 0.0, %v395
    %397 = vdwg.mxu0
    %v398 = vld [vmem:[#allocation6] sm:$0xff]
    %v399 = vld [vmem:[#allocation6 + $0x10] sm:$0xff]
    %v400 = vld [vmem:[#allocation6 + $0x20] sm:$0xff]
    %v401 = vld [vmem:[#allocation6 + $0x30] sm:$0xff]
    %v402 = vld [vmem:[#allocation6 + $0x8] sm:$0xff]
    %v403 = vld [vmem:[#allocation6 + $0x18] sm:$0xff]
    %v404 = vld [vmem:[#allocation6 + $0x28] sm:$0xff]
    %v405 = vld [vmem:[#allocation6 + $0x38] sm:$0xff]
    %v406 = vmul.f32 %v327, %v398
    %v407 = vmul.f32 %v331, %v399
    %v408 = vmul.f32 %v337, %v400
    %v409 = vmul.f32 %v341, %v401
    %v410 = vmul.f32 %v380, %v402
    %v411 = vmul.f32 %v384, %v403
    %v412 = vmul.f32 %v390, %v404
    %v413 = vmul.f32 %v394, %v405
    %v414 = vadd.f32 %v406, %v410
    %v415 = vadd.f32 %v407, %v411
    %v416 = vadd.f32 %v408, %v412
    %v417 = vadd.f32 %v409, %v413
    %v418 = vmul.f32 %v329, %v398
    %v419 = vmul.f32 %v333, %v399
    %v420 = vmul.f32 %v339, %v400
    %v421 = vmul.f32 %v343, %v401
    %v422 = vmul.f32 %v382, %v402
    %v423 = vmul.f32 %v386, %v403
    %v424 = vmul.f32 %v392, %v404
    %v425 = vmul.f32 %v396, %v405
    %v426 = vadd.f32 %v418, %v422
    %v427 = vadd.f32 %v419, %v423
    %v428 = vadd.f32 %v420, %v424
    %v429 = vadd.f32 %v421, %v425
    %v430 = vpack.c.bf16 %v415, %v414
    %v431 = vpack.c.bf16 %v417, %v416
    %v432 = vpack.c.bf16 %v427, %v426
    %v433 = vpack.c.bf16 %v429, %v428
    %v434 = vpack.c.bf16 %v333, %v329
    %v435 = vpack.c.bf16 %v343, %v339
    %v436 = vlaneseq
    %v437 = vshrl.u32 %v436, 7
    %v438 = vadd.s32 %v437, 8
    %v439 = vlaneseq
    %v440 = vand.u32 %v439, 127
    %vm441 = vcmp.ge.s32.totalorder %v437, %v440
    %vm442 = vcmp.ge.s32.totalorder %v438, %v440
    %v443 = vsel %vm441, 0.0, -1e+30
    %v444 = vsel %vm442, 0.0, -1e+30
    %vm445 = vcmask 261120
    %v447 = vsel %vm445, %v430, 0
    %v450 = vsel %vm445, %v432, 0
    %452 = vmatprep.subr.bf16.mxu0 0
    %453 = vmatpush1.bf16.xpose.msra.mxu0 %v450
    %454 = vmatprep.subr.bf16.mxu0 0
    %455 = vmatpush1.bf16.xpose.msra.mxu0 0
    %456 = vmatprep.subr.bf16.mxu0 0
    %457 = vmatpush1.bf16.xpose.msra.mxu0 0
    %458 = vmatprep.subr.bf16.mxu0 0
    %459 = vmatpush1.bf16.xpose.msra.mxu0 0
    %460 = vmatprep.subr.bf16.mxu0 0
    %461 = vmatpush1.bf16.xpose.msra.mxu0 0
    %462 = vmatprep.subr.bf16.mxu0 0
    %463 = vmatpush1.bf16.xpose.msra.mxu0 0
    %464 = vmatprep.subr.bf16.mxu0 0
    %465 = vmatpush1.bf16.xpose.msra.mxu0 0
    %466 = vmatprep.subr.bf16.mxu0 0
    %467 = vmatpush1.bf16.xpose.msra.mxu0 0
    %468 = vmatprep.subr.bf16.mxu0 0
    %469 = vmatpush1.bf16.xpose.msra.mxu0 0
    %470 = vmatprep.subr.bf16.mxu0 0
    %471 = vmatpush1.bf16.xpose.msra.mxu0 0
    %472 = vmatprep.subr.bf16.mxu0 0
    %473 = vmatpush1.bf16.xpose.msra.mxu0 0
    %474 = vmatprep.subr.bf16.mxu0 0
    %475 = vmatpush1.bf16.xpose.msra.mxu0 0
    %476 = vmatprep.subr.bf16.mxu0 0
    %477 = vmatpush1.bf16.xpose.msra.mxu0 0
    %478 = vmatprep.subr.bf16.mxu0 0
    %479 = vmatpush1.bf16.xpose.msra.mxu0 0
    %480 = vmatprep.subr.bf16.mxu0 0
    %481 = vmatpush1.bf16.xpose.msra.mxu0 0
    %482 = vmatprep.subr.bf16.mxu0 0
    %483 = vmatpush1.bf16.xpose.msra.mxu0 0
    %484 = vmatprep.mubr.bf16.mxu0 0
    %485 = vmatmul.mubr.bf16.gmra.mrb[0].mxu0 %v447
    %v486 = vpop.f32.mrb[0].mxu0
    %v487 = vadd.f32 0.0, %v486
    %v488 = vpop.f32.mrb[0].mxu0
    %v489 = vpop.f32.mrb[0].mxu0
    %v490 = vadd.f32 0.0, %v489
    %v491 = vpop.f32.mrb[0].mxu0
    %492 = vdwg.mxu0
    %v493 = vmul.f32 %v487, 0.17677669
    %v494 = vmul.f32 %v490, 0.17677669
    %v495 = vadd.f32 %v493, %v443
    %v496 = vadd.f32 %v494, %v444
    %vm497 = vcmask 130048
    %v498 = vsel %vm497, %v495, -inf
    %499 = vmax.xlane.f32.xlu0 %v498
    %v500 = vpop.xlane.xlu0 %499
    %v501 = vsel %vm497, %v496, -inf
    %502 = vmax.xlane.f32.xlu0 %v501
    %v503 = vpop.xlane.xlu0 %502
    %v504 = vsub.f32 %v495, %v500
    %v505 = vsub.f32 %v496, %v503
    %v506 = vmul.f32 %v504, 1.442695
    %v507 = vpow.pop %v506
    %v508 = vmul.f32 %v505, 1.442695
    %v509 = vpow.pop %v508
    %v510 = vsel %vm497, %v507, 0.0
    %511 = vadd.xlane.f32.xlu0 %v510
    %v512 = vpop.xlane.xlu0 %511
    %v513 = vsel %vm497, %v509, 0.0
    %514 = vadd.xlane.f32.xlu0 %v513
    %v515 = vpop.xlane.xlu0 %514
    %v516 = vrcp.pop %v512
    %v517 = vrcp.pop %v515
    %v518 = vmul.f32 %v507, %v516
    %v519 = vmul.f32 %v509, %v517
    %v520 = vpack.c.bf16 %v519, %v518
    %522 = vrot.lane.b32.xlu0 %v434, 64
    %v523 = vpop.permute.xlu0 %522
    %v526 = vsel %vm497, %v520, 0
    %528 = vmatprep.subr.bf16.mxu0 0
    %529 = vmatpush1.bf16.msra.mxu0 %v523
    %530 = vmatprep.subr.bf16.mxu0 0
    %531 = vmatpush1.bf16.msra.mxu0 0
    %532 = vmatprep.subr.bf16.mxu0 0
    %533 = vmatpush1.bf16.msra.mxu0 0
    %534 = vmatprep.subr.bf16.mxu0 0
    %535 = vmatpush1.bf16.msra.mxu0 0
    %536 = vmatprep.subr.bf16.mxu0 0
    %537 = vmatpush1.bf16.msra.mxu0 0
    %538 = vmatprep.subr.bf16.mxu0 0
    %539 = vmatpush1.bf16.msra.mxu0 0
    %540 = vmatprep.subr.bf16.mxu0 0
    %541 = vmatpush1.bf16.msra.mxu0 0
    %542 = vmatprep.subr.bf16.mxu0 0
    %543 = vmatpush1.bf16.msra.mxu0 0
    %544 = vmatprep.subr.bf16.mxu0 0
    %545 = vmatpush1.bf16.msra.mxu0 0
    %546 = vmatprep.subr.bf16.mxu0 0
    %547 = vmatpush1.bf16.msra.mxu0 0
    %548 = vmatprep.subr.bf16.mxu0 0
    %549 = vmatpush1.bf16.msra.mxu0 0
    %550 = vmatprep.subr.bf16.mxu0 0
    %551 = vmatpush1.bf16.msra.mxu0 0
    %552 = vmatprep.subr.bf16.mxu0 0
    %553 = vmatpush1.bf16.msra.mxu0 0
    %554 = vmatprep.subr.bf16.mxu0 0
    %555 = vmatpush1.bf16.msra.mxu0 0
    %556 = vmatprep.subr.bf16.mxu0 0
    %557 = vmatpush1.bf16.msra.mxu0 0
    %558 = vmatprep.subr.bf16.mxu0 0
    %559 = vmatpush1.bf16.msra.mxu0 0
    %560 = vmatprep.mubr.bf16.mxu0 0
    %561 = vmatmul.mubr.bf16.gmra.mrb[0].mxu0 %v526
    %v562 = vpop.f32.mrb[0].mxu0
    %v563 = vadd.f32 0.0, %v562
    %v564 = vpop.f32.mrb[0].mxu0
    %v565 = vpop.f32.mrb[0].mxu0
    %v566 = vadd.f32 0.0, %v565
    %v567 = vpop.f32.mrb[0].mxu0
    %568 = vdwg.mxu0
    %569 = vst.msk [vmem:[#allocation2] sm:$0xff] %vm445, %v563
    %570 = vst.msk [vmem:[#allocation2 + $0x8] sm:$0xff] %vm445, %v566
    %572 = vrot.lane.b32.xlu0 %v430, 96
    %v573 = vpop.permute.xlu0 %572
    %v575 = vsel %vm445, %v573, 0
    %577 = vmatprep.subr.bf16.mxu0 0
    %578 = vmatpush1.bf16.xpose.msra.mxu0 %v450
    %579 = vmatprep.subr.bf16.mxu0 0
    %580 = vmatpush1.bf16.xpose.msra.mxu0 0
    %581 = vmatprep.subr.bf16.mxu0 0
    %582 = vmatpush1.bf16.xpose.msra.mxu0 0
    %583 = vmatprep.subr.bf16.mxu0 0
    %584 = vmatpush1.bf16.xpose.msra.mxu0 0
    %585 = vmatprep.subr.bf16.mxu0 0
    %586 = vmatpush1.bf16.xpose.msra.mxu0 0
    %587 = vmatprep.subr.bf16.mxu0 0
    %588 = vmatpush1.bf16.xpose.msra.mxu0 0
    %589 = vmatprep.subr.bf16.mxu0 0
    %590 = vmatpush1.bf16.xpose.msra.mxu0 0
    %591 = vmatprep.subr.bf16.mxu0 0
    %592 = vmatpush1.bf16.xpose.msra.mxu0 0
    %593 = vmatprep.subr.bf16.mxu0 0
    %594 = vmatpush1.bf16.xpose.msra.mxu0 0
    %595 = vmatprep.subr.bf16.mxu0 0
    %596 = vmatpush1.bf16.xpose.msra.mxu0 0
    %597 = vmatprep.subr.bf16.mxu0 0
    %598 = vmatpush1.bf16.xpose.msra.mxu0 0
    %599 = vmatprep.subr.bf16.mxu0 0
    %600 = vmatpush1.bf16.xpose.msra.mxu0 0
    %601 = vmatprep.subr.bf16.mxu0 0
    %602 = vmatpush1.bf16.xpose.msra.mxu0 0
    %603 = vmatprep.subr.bf16.mxu0 0
    %604 = vmatpush1.bf16.xpose.msra.mxu0 0
    %605 = vmatprep.subr.bf16.mxu0 0
    %606 = vmatpush1.bf16.xpose.msra.mxu0 0
    %607 = vmatprep.subr.bf16.mxu0 0
    %608 = vmatpush1.bf16.xpose.msra.mxu0 0
    %609 = vmatprep.mubr.bf16.mxu0 0
    %610 = vmatmul.mubr.bf16.gmra.mrb[0].mxu0 %v575
    %v611 = vpop.f32.mrb[0].mxu0
    %v612 = vadd.f32 0.0, %v611
    %v613 = vpop.f32.mrb[0].mxu0
    %v614 = vpop.f32.mrb[0].mxu0
    %v615 = vadd.f32 0.0, %v614
    %v616 = vpop.f32.mrb[0].mxu0
    %617 = vdwg.mxu0
    %v618 = vmul.f32 %v612, 0.17677669
    %v619 = vmul.f32 %v615, 0.17677669
    %v620 = vadd.f32 %v618, %v443
    %v621 = vadd.f32 %v619, %v444
    %v622 = vsel %vm497, %v620, -inf
    %623 = vmax.xlane.f32.xlu0 %v622
    %v624 = vpop.xlane.xlu0 %623
    %v625 = vsel %vm497, %v621, -inf
    %626 = vmax.xlane.f32.xlu0 %v625
    %v627 = vpop.xlane.xlu0 %626
    %v628 = vsub.f32 %v620, %v624
    %v629 = vsub.f32 %v621, %v627
    %v630 = vmul.f32 %v628, 1.442695
    %v631 = vpow.pop %v630
    %v632 = vmul.f32 %v629, 1.442695
    %v633 = vpow.pop %v632
    %v634 = vsel %vm497, %v631, 0.0
    %635 = vadd.xlane.f32.xlu0 %v634
    %v636 = vpop.xlane.xlu0 %635
    %v637 = vsel %vm497, %v633, 0.0
    %638 = vadd.xlane.f32.xlu0 %v637
    %v639 = vpop.xlane.xlu0 %638
    %v640 = vrcp.pop %v636
    %v641 = vrcp.pop %v639
    %v642 = vmul.f32 %v631, %v640
    %v643 = vmul.f32 %v633, %v641
    %v644 = vpack.c.bf16 %v643, %v642
    %v646 = vsel %vm497, %v644, 0
    %648 = vmatprep.subr.bf16.mxu0 0
    %649 = vmatpush1.bf16.msra.mxu0 %v523
    %650 = vmatprep.subr.bf16.mxu0 0
    %651 = vmatpush1.bf16.msra.mxu0 0
    %652 = vmatprep.subr.bf16.mxu0 0
    %653 = vmatpush1.bf16.msra.mxu0 0
    %654 = vmatprep.subr.bf16.mxu0 0
    %655 = vmatpush1.bf16.msra.mxu0 0
    %656 = vmatprep.subr.bf16.mxu0 0
    %657 = vmatpush1.bf16.msra.mxu0 0
    %658 = vmatprep.subr.bf16.mxu0 0
    %659 = vmatpush1.bf16.msra.mxu0 0
    %660 = vmatprep.subr.bf16.mxu0 0
    %661 = vmatpush1.bf16.msra.mxu0 0
    %662 = vmatprep.subr.bf16.mxu0 0
    %663 = vmatpush1.bf16.msra.mxu0 0
    %664 = vmatprep.subr.bf16.mxu0 0
    %665 = vmatpush1.bf16.msra.mxu0 0
    %666 = vmatprep.subr.bf16.mxu0 0
    %667 = vmatpush1.bf16.msra.mxu0 0
    %668 = vmatprep.subr.bf16.mxu0 0
    %669 = vmatpush1.bf16.msra.mxu0 0
    %670 = vmatprep.subr.bf16.mxu0 0
    %671 = vmatpush1.bf16.msra.mxu0 0
    %672 = vmatprep.subr.bf16.mxu0 0
    %673 = vmatpush1.bf16.msra.mxu0 0
    %674 = vmatprep.subr.bf16.mxu0 0
    %675 = vmatpush1.bf16.msra.mxu0 0
    %676 = vmatprep.subr.bf16.mxu0 0
    %677 = vmatpush1.bf16.msra.mxu0 0
    %678 = vmatprep.subr.bf16.mxu0 0
    %679 = vmatpush1.bf16.msra.mxu0 0
    %680 = vmatprep.mubr.bf16.mxu0 0
    %681 = vmatmul.mubr.bf16.gmra.mrb[0].mxu0 %v646
    %v682 = vpop.f32.mrb[0].mxu0
    %v683 = vadd.f32 0.0, %v682
    %v684 = vpop.f32.mrb[0].mxu0
    %v685 = vpop.f32.mrb[0].mxu0
    %v686 = vadd.f32 0.0, %v685
    %v687 = vpop.f32.mrb[0].mxu0
    %688 = vdwg.mxu0
    %691 = vrot.lane.b32.xlu0 %v683, 32
    %v692 = vpop.permute.xlu0 %691
    %693 = vrot.lane.b32.xlu0 %v686, 32
    %v694 = vpop.permute.xlu0 %693
    %vm697 = vcmask 523520
    %698 = vst.msk [vmem:[#allocation2] sm:$0xff] %vm697, %v692
    %699 = vst.msk [vmem:[#allocation2 + $0x8] sm:$0xff] %vm697, %v694
    %700 = vrot.lane.b32.xlu0 %v430, 64
    %v701 = vpop.permute.xlu0 %700
    %703 = vrot.lane.b32.xlu0 %v432, 96
    %v704 = vpop.permute.xlu0 %703
    %v706 = vsel %vm445, %v701, 0
    %v709 = vsel %vm445, %v704, 0
    %711 = vmatprep.subr.bf16.mxu0 0
    %712 = vmatpush1.bf16.xpose.msra.mxu0 %v709
    %713 = vmatprep.subr.bf16.mxu0 0
    %714 = vmatpush1.bf16.xpose.msra.mxu0 0
    %715 = vmatprep.subr.bf16.mxu0 0
    %716 = vmatpush1.bf16.xpose.msra.mxu0 0
    %717 = vmatprep.subr.bf16.mxu0 0
    %718 = vmatpush1.bf16.xpose.msra.mxu0 0
    %719 = vmatprep.subr.bf16.mxu0 0
    %720 = vmatpush1.bf16.xpose.msra.mxu0 0
    %721 = vmatprep.subr.bf16.mxu0 0
    %722 = vmatpush1.bf16.xpose.msra.mxu0 0
    %723 = vmatprep.subr.bf16.mxu0 0
    %724 = vmatpush1.bf16.xpose.msra.mxu0 0
    %725 = vmatprep.subr.bf16.mxu0 0
    %726 = vmatpush1.bf16.xpose.msra.mxu0 0
    %727 = vmatprep.subr.bf16.mxu0 0
    %728 = vmatpush1.bf16.xpose.msra.mxu0 0
    %729 = vmatprep.subr.bf16.mxu0 0
    %730 = vmatpush1.bf16.xpose.msra.mxu0 0
    %731 = vmatprep.subr.bf16.mxu0 0
    %732 = vmatpush1.bf16.xpose.msra.mxu0 0
    %733 = vmatprep.subr.bf16.mxu0 0
    %734 = vmatpush1.bf16.xpose.msra.mxu0 0
    %735 = vmatprep.subr.bf16.mxu0 0
    %736 = vmatpush1.bf16.xpose.msra.mxu0 0
    %737 = vmatprep.subr.bf16.mxu0 0
    %738 = vmatpush1.bf16.xpose.msra.mxu0 0
    %739 = vmatprep.subr.bf16.mxu0 0
    %740 = vmatpush1.bf16.xpose.msra.mxu0 0
    %741 = vmatprep.subr.bf16.mxu0 0
    %742 = vmatpush1.bf16.xpose.msra.mxu0 0
    %743 = vmatprep.mubr.bf16.mxu0 0
    %744 = vmatmul.mubr.bf16.gmra.mrb[0].mxu0 %v706
    %v745 = vpop.f32.mrb[0].mxu0
    %v746 = vadd.f32 0.0, %v745
    %v747 = vpop.f32.mrb[0].mxu0
    %v748 = vpop.f32.mrb[0].mxu0
    %v749 = vadd.f32 0.0, %v748
    %v750 = vpop.f32.mrb[0].mxu0
    %751 = vdwg.mxu0
    %v752 = vmul.f32 %v746, 0.17677669
    %v753 = vmul.f32 %v749, 0.17677669
    %v754 = vadd.f32 %v752, %v443
    %v755 = vadd.f32 %v753, %v444
    %v756 = vsel %vm497, %v754, -inf
    %757 = vmax.xlane.f32.xlu0 %v756
    %v758 = vpop.xlane.xlu0 %757
    %v759 = vsel %vm497, %v755, -inf
    %760 = vmax.xlane.f32.xlu0 %v759
    %v761 = vpop.xlane.xlu0 %760
    %v762 = vsub.f32 %v754, %v758
    %v763 = vsub.f32 %v755, %v761
    %v764 = vmul.f32 %v762, 1.442695
    %v765 = vpow.pop %v764
    %v766 = vmul.f32 %v763, 1.442695
    %v767 = vpow.pop %v766
    %v768 = vsel %vm497, %v765, 0.0
    %769 = vadd.xlane.f32.xlu0 %v768
    %v770 = vpop.xlane.xlu0 %769
    %v771 = vsel %vm497, %v767, 0.0
    %772 = vadd.xlane.f32.xlu0 %v771
    %v773 = vpop.xlane.xlu0 %772
    %v774 = vrcp.pop %v770
    %v775 = vrcp.pop %v773
    %v776 = vmul.f32 %v765, %v774
    %v777 = vmul.f32 %v767, %v775
    %v778 = vpack.c.bf16 %v777, %v776
    %779 = vrot.lane.b32.xlu0 %v434, 32
    %v780 = vpop.permute.xlu0 %779
    %v783 = vsel %vm497, %v778, 0
    %785 = vmatprep.subr.bf16.mxu0 0
    %786 = vmatpush1.bf16.msra.mxu0 %v780
    %787 = vmatprep.subr.bf16.mxu0 0
    %788 = vmatpush1.bf16.msra.mxu0 0
    %789 = vmatprep.subr.bf16.mxu0 0
    %790 = vmatpush1.bf16.msra.mxu0 0
    %791 = vmatprep.subr.bf16.mxu0 0
    %792 = vmatpush1.bf16.msra.mxu0 0
    %793 = vmatprep.subr.bf16.mxu0 0
    %794 = vmatpush1.bf16.msra.mxu0 0
    %795 = vmatprep.subr.bf16.mxu0 0
    %796 = vmatpush1.bf16.msra.mxu0 0
    %797 = vmatprep.subr.bf16.mxu0 0
    %798 = vmatpush1.bf16.msra.mxu0 0
    %799 = vmatprep.subr.bf16.mxu0 0
    %800 = vmatpush1.bf16.msra.mxu0 0
    %801 = vmatprep.subr.bf16.mxu0 0
    %802 = vmatpush1.bf16.msra.mxu0 0
    %803 = vmatprep.subr.bf16.mxu0 0
    %804 = vmatpush1.bf16.msra.mxu0 0
    %805 = vmatprep.subr.bf16.mxu0 0
    %806 = vmatpush1.bf16.msra.mxu0 0
    %807 = vmatprep.subr.bf16.mxu0 0
    %808 = vmatpush1.bf16.msra.mxu0 0
    %809 = vmatprep.subr.bf16.mxu0 0
    %810 = vmatpush1.bf16.msra.mxu0 0
    %811 = vmatprep.subr.bf16.mxu0 0
    %812 = vmatpush1.bf16.msra.mxu0 0
    %813 = vmatprep.subr.bf16.mxu0 0
    %814 = vmatpush1.bf16.msra.mxu0 0
    %815 = vmatprep.subr.bf16.mxu0 0
    %816 = vmatpush1.bf16.msra.mxu0 0
    %817 = vmatprep.mubr.bf16.mxu0 0
    %818 = vmatmul.mubr.bf16.gmra.mrb[0].mxu0 %v783
    %v819 = vpop.f32.mrb[0].mxu0
    %v820 = vadd.f32 0.0, %v819
    %v821 = vpop.f32.mrb[0].mxu0
    %v822 = vpop.f32.mrb[0].mxu0
    %v823 = vadd.f32 0.0, %v822
    %v824 = vpop.f32.mrb[0].mxu0
    %825 = vdwg.mxu0
    %828 = vrot.lane.b32.xlu0 %v820, 64
    %v829 = vpop.permute.xlu0 %828
    %830 = vrot.lane.b32.xlu0 %v823, 64
    %v831 = vpop.permute.xlu0 %830
    %vm834 = vcmask 785920
    %835 = vst.msk [vmem:[#allocation2] sm:$0xff] %vm834, %v829
    %836 = vst.msk [vmem:[#allocation2 + $0x8] sm:$0xff] %vm834, %v831
    %837 = vrot.lane.b32.xlu0 %v430, 32
    %v838 = vpop.permute.xlu0 %837
    %v840 = vsel %vm445, %v838, 0
    %842 = vmatprep.subr.bf16.mxu0 0
    %843 = vmatpush1.bf16.xpose.msra.mxu0 %v709
    %844 = vmatprep.subr.bf16.mxu0 0
    %845 = vmatpush1.bf16.xpose.msra.mxu0 0
    %846 = vmatprep.subr.bf16.mxu0 0
    %847 = vmatpush1.bf16.xpose.msra.mxu0 0
    %848 = vmatprep.subr.bf16.mxu0 0
    %849 = vmatpush1.bf16.xpose.msra.mxu0 0
    %850 = vmatprep.subr.bf16.mxu0 0
    %851 = vmatpush1.bf16.xpose.msra.mxu0 0
    %852 = vmatprep.subr.bf16.mxu0 0
    %853 = vmatpush1.bf16.xpose.msra.mxu0 0
    %854 = vmatprep.subr.bf16.mxu0 0
    %855 = vmatpush1.bf16.xpose.msra.mxu0 0
    %856 = vmatprep.subr.bf16.mxu0 0
    %857 = vmatpush1.bf16.xpose.msra.mxu0 0
    %858 = vmatprep.subr.bf16.mxu0 0
    %859 = vmatpush1.bf16.xpose.msra.mxu0 0
    %860 = vmatprep.subr.bf16.mxu0 0
    %861 = vmatpush1.bf16.xpose.msra.mxu0 0
    %862 = vmatprep.subr.bf16.mxu0 0
    %863 = vmatpush1.bf16.xpose.msra.mxu0 0
    %864 = vmatprep.subr.bf16.mxu0 0
    %865 = vmatpush1.bf16.xpose.msra.mxu0 0
    %866 = vmatprep.subr.bf16.mxu0 0
    %867 = vmatpush1.bf16.xpose.msra.mxu0 0
    %868 = vmatprep.subr.bf16.mxu0 0
    %869 = vmatpush1.bf16.xpose.msra.mxu0 0
    %870 = vmatprep.subr.bf16.mxu0 0
    %871 = vmatpush1.bf16.xpose.msra.mxu0 0
    %872 = vmatprep.subr.bf16.mxu0 0
    %873 = vmatpush1.bf16.xpose.msra.mxu0 0
    %874 = vmatprep.mubr.bf16.mxu0 0
    %875 = vmatmul.mubr.bf16.gmra.mrb[0].mxu0 %v840
    %v876 = vpop.f32.mrb[0].mxu0
    %v877 = vadd.f32 0.0, %v876
    %v878 = vpop.f32.mrb[0].mxu0
    %v879 = vpop.f32.mrb[0].mxu0
    %v880 = vadd.f32 0.0, %v879
    %v881 = vpop.f32.mrb[0].mxu0
    %882 = vdwg.mxu0
    %v883 = vmul.f32 %v877, 0.17677669
    %v884 = vmul.f32 %v880, 0.17677669
    %v885 = vadd.f32 %v883, %v443
    %v886 = vadd.f32 %v884, %v444
    %v887 = vsel %vm497, %v885, -inf
    %888 = vmax.xlane.f32.xlu0 %v887
    %v889 = vpop.xlane.xlu0 %888
    %v890 = vsel %vm497, %v886, -inf
    %891 = vmax.xlane.f32.xlu0 %v890
    %v892 = vpop.xlane.xlu0 %891
    %v893 = vsub.f32 %v885, %v889
    %v894 = vsub.f32 %v886, %v892
    %v895 = vmul.f32 %v893, 1.442695
    %v896 = vpow.pop %v895
    %v897 = vmul.f32 %v894, 1.442695
    %v898 = vpow.pop %v897
    %v899 = vsel %vm497, %v896, 0.0
    %900 = vadd.xlane.f32.xlu0 %v899
    %v901 = vpop.xlane.xlu0 %900
    %v902 = vsel %vm497, %v898, 0.0
    %903 = vadd.xlane.f32.xlu0 %v902
    %v904 = vpop.xlane.xlu0 %903
    %v905 = vrcp.pop %v901
    %v906 = vrcp.pop %v904
    %v907 = vmul.f32 %v896, %v905
    %v908 = vmul.f32 %v898, %v906
    %v909 = vpack.c.bf16 %v908, %v907
    %v911 = vsel %vm497, %v909, 0
    %913 = vmatprep.subr.bf16.mxu0 0
    %914 = vmatpush1.bf16.msra.mxu0 %v780
    %915 = vmatprep.subr.bf16.mxu0 0
    %916 = vmatpush1.bf16.msra.mxu0 0
    %917 = vmatprep.subr.bf16.mxu0 0
    %918 = vmatpush1.bf16.msra.mxu0 0
    %919 = vmatprep.subr.bf16.mxu0 0
    %920 = vmatpush1.bf16.msra.mxu0 0
    %921 = vmatprep.subr.bf16.mxu0 0
    %922 = vmatpush1.bf16.msra.mxu0 0
    %923 = vmatprep.subr.bf16.mxu0 0
    %924 = vmatpush1.bf16.msra.mxu0 0
    %925 = vmatprep.subr.bf16.mxu0 0
    %926 = vmatpush1.bf16.msra.mxu0 0
    %927 = vmatprep.subr.bf16.mxu0 0
    %928 = vmatpush1.bf16.msra.mxu0 0
    %929 = vmatprep.subr.bf16.mxu0 0
    %930 = vmatpush1.bf16.msra.mxu0 0
    %931 = vmatprep.subr.bf16.mxu0 0
    %932 = vmatpush1.bf16.msra.mxu0 0
    %933 = vmatprep.subr.bf16.mxu0 0
    %934 = vmatpush1.bf16.msra.mxu0 0
    %935 = vmatprep.subr.bf16.mxu0 0
    %936 = vmatpush1.bf16.msra.mxu0 0
    %937 = vmatprep.subr.bf16.mxu0 0
    %938 = vmatpush1.bf16.msra.mxu0 0
    %939 = vmatprep.subr.bf16.mxu0 0
    %940 = vmatpush1.bf16.msra.mxu0 0
    %941 = vmatprep.subr.bf16.mxu0 0
    %942 = vmatpush1.bf16.msra.mxu0 0
    %943 = vmatprep.subr.bf16.mxu0 0
    %944 = vmatpush1.bf16.msra.mxu0 0
    %945 = vmatprep.mubr.bf16.mxu0 0
    %946 = vmatmul.mubr.bf16.gmra.mrb[0].mxu0 %v911
    %v947 = vpop.f32.mrb[0].mxu0
    %v948 = vadd.f32 0.0, %v947
    %v949 = vpop.f32.mrb[0].mxu0
    %v950 = vpop.f32.mrb[0].mxu0
    %v951 = vadd.f32 0.0, %v950
    %v952 = vpop.f32.mrb[0].mxu0
    %953 = vdwg.mxu0
    %956 = vrot.lane.b32.xlu0 %v948, 96
    %v957 = vpop.permute.xlu0 %956
    %958 = vrot.lane.b32.xlu0 %v951, 96
    %v959 = vpop.permute.xlu0 %958
    %vm962 = vcmask 1048320
    %963 = vst.msk [vmem:[#allocation2] sm:$0xff] %vm962, %v957
    %964 = vst.msk [vmem:[#allocation2 + $0x8] sm:$0xff] %vm962, %v959
    %v966 = vsel %vm445, %v431, 0
    %v969 = vsel %vm445, %v433, 0
    %971 = vmatprep.subr.bf16.mxu0 0
    %972 = vmatpush1.bf16.xpose.msra.mxu0 %v969
    %973 = vmatprep.subr.bf16.mxu0 0
    %974 = vmatpush1.bf16.xpose.msra.mxu0 0
    %975 = vmatprep.subr.bf16.mxu0 0
    %976 = vmatpush1.bf16.xpose.msra.mxu0 0
    %977 = vmatprep.subr.bf16.mxu0 0
    %978 = vmatpush1.bf16.xpose.msra.mxu0 0
    %979 = vmatprep.subr.bf16.mxu0 0
    %980 = vmatpush1.bf16.xpose.msra.mxu0 0
    %981 = vmatprep.subr.bf16.mxu0 0
    %982 = vmatpush1.bf16.xpose.msra.mxu0 0
    %983 = vmatprep.subr.bf16.mxu0 0
    %984 = vmatpush1.bf16.xpose.msra.mxu0 0
    %985 = vmatprep.subr.bf16.mxu0 0
    %986 = vmatpush1.bf16.xpose.msra.mxu0 0
    %987 = vmatprep.subr.bf16.mxu0 0
    %988 = vmatpush1.bf16.xpose.msra.mxu0 0
    %989 = vmatprep.subr.bf16.mxu0 0
    %990 = vmatpush1.bf16.xpose.msra.mxu0 0
    %991 = vmatprep.subr.bf16.mxu0 0
    %992 = vmatpush1.bf16.xpose.msra.mxu0 0
    %993 = vmatprep.subr.bf16.mxu0 0
    %994 = vmatpush1.bf16.xpose.msra.mxu0 0
    %995 = vmatprep.subr.bf16.mxu0 0
    %996 = vmatpush1.bf16.xpose.msra.mxu0 0
    %997 = vmatprep.subr.bf16.mxu0 0
    %998 = vmatpush1.bf16.xpose.msra.mxu0 0
    %999 = vmatprep.subr.bf16.mxu0 0
    %1000 = vmatpush1.bf16.xpose.msra.mxu0 0
    %1001 = vmatprep.subr.bf16.mxu0 0
    %1002 = vmatpush1.bf16.xpose.msra.mxu0 0
    %1003 = vmatprep.mubr.bf16.mxu0 0
    %1004 = vmatmul.mubr.bf16.gmra.mrb[0].mxu0 %v966
    %v1005 = vpop.f32.mrb[0].mxu0
    %v1006 = vadd.f32 0.0, %v1005
    %v1007 = vpop.f32.mrb[0].mxu0
    %v1008 = vpop.f32.mrb[0].mxu0
    %v1009 = vadd.f32 0.0, %v1008
    %v1010 = vpop.f32.mrb[0].mxu0
    %1011 = vdwg.mxu0
    %v1012 = vmul.f32 %v1006, 0.17677669
    %v1013 = vmul.f32 %v1009, 0.17677669
    %v1014 = vadd.f32 %v1012, %v443
    %v1015 = vadd.f32 %v1013, %v444
    %v1016 = vsel %vm497, %v1014, -inf
    %1017 = vmax.xlane.f32.xlu0 %v1016
    %v1018 = vpop.xlane.xlu0 %1017
    %v1019 = vsel %vm497, %v1015, -inf
    %1020 = vmax.xlane.f32.xlu0 %v1019
    %v1021 = vpop.xlane.xlu0 %1020
    %v1022 = vsub.f32 %v1014, %v1018
    %v1023 = vsub.f32 %v1015, %v1021
    %v1024 = vmul.f32 %v1022, 1.442695
    %v1025 = vpow.pop %v1024
    %v1026 = vmul.f32 %v1023, 1.442695
    %v1027 = vpow.pop %v1026
    %v1028 = vsel %vm497, %v1025, 0.0
    %1029 = vadd.xlane.f32.xlu0 %v1028
    %v1030 = vpop.xlane.xlu0 %1029
    %v1031 = vsel %vm497, %v1027, 0.0
    %1032 = vadd.xlane.f32.xlu0 %v1031
    %v1033 = vpop.xlane.xlu0 %1032
    %v1034 = vrcp.pop %v1030
    %v1035 = vrcp.pop %v1033
    %v1036 = vmul.f32 %v1025, %v1034
    %v1037 = vmul.f32 %v1027, %v1035
    %v1038 = vpack.c.bf16 %v1037, %v1036
    %1040 = vrot.lane.b32.xlu0 %v435, 64
    %v1041 = vpop.permute.xlu0 %1040
    %v1044 = vsel %vm497, %v1038, 0
    %1046 = vmatprep.subr.bf16.mxu0 0
    %1047 = vmatpush1.bf16.msra.mxu0 %v1041
    %1048 = vmatprep.subr.bf16.mxu0 0
    %1049 = vmatpush1.bf16.msra.mxu0 0
    %1050 = vmatprep.subr.bf16.mxu0 0
    %1051 = vmatpush1.bf16.msra.mxu0 0
    %1052 = vmatprep.subr.bf16.mxu0 0
    %1053 = vmatpush1.bf16.msra.mxu0 0
    %1054 = vmatprep.subr.bf16.mxu0 0
    %1055 = vmatpush1.bf16.msra.mxu0 0
    %1056 = vmatprep.subr.bf16.mxu0 0
    %1057 = vmatpush1.bf16.msra.mxu0 0
    %1058 = vmatprep.subr.bf16.mxu0 0
    %1059 = vmatpush1.bf16.msra.mxu0 0
    %1060 = vmatprep.subr.bf16.mxu0 0
    %1061 = vmatpush1.bf16.msra.mxu0 0
    %1062 = vmatprep.subr.bf16.mxu0 0
    %1063 = vmatpush1.bf16.msra.mxu0 0
    %1064 = vmatprep.subr.bf16.mxu0 0
    %1065 = vmatpush1.bf16.msra.mxu0 0
    %1066 = vmatprep.subr.bf16.mxu0 0
    %1067 = vmatpush1.bf16.msra.mxu0 0
    %1068 = vmatprep.subr.bf16.mxu0 0
    %1069 = vmatpush1.bf16.msra.mxu0 0
    %1070 = vmatprep.subr.bf16.mxu0 0
    %1071 = vmatpush1.bf16.msra.mxu0 0
    %1072 = vmatprep.subr.bf16.mxu0 0
    %1073 = vmatpush1.bf16.msra.mxu0 0
    %1074 = vmatprep.subr.bf16.mxu0 0
    %1075 = vmatpush1.bf16.msra.mxu0 0
    %1076 = vmatprep.subr.bf16.mxu0 0
    %1077 = vmatpush1.bf16.msra.mxu0 0
    %1078 = vmatprep.mubr.bf16.mxu0 0
    %1079 = vmatmul.mubr.bf16.gmra.mrb[0].mxu0 %v1044
    %v1080 = vpop.f32.mrb[0].mxu0
    %v1081 = vadd.f32 0.0, %v1080
    %v1082 = vpop.f32.mrb[0].mxu0
    %v1083 = vpop.f32.mrb[0].mxu0
    %v1084 = vadd.f32 0.0, %v1083
    %v1085 = vpop.f32.mrb[0].mxu0
    %1086 = vdwg.mxu0
    %1087 = vst.msk [vmem:[#allocation2 + $0x10] sm:$0xff] %vm445, %v1081
    %1088 = vst.msk [vmem:[#allocation2 + $0x18] sm:$0xff] %vm445, %v1084
    %1090 = vrot.lane.b32.xlu0 %v431, 96
    %v1091 = vpop.permute.xlu0 %1090
    %v1093 = vsel %vm445, %v1091, 0
    %1095 = vmatprep.subr.bf16.mxu0 0
    %1096 = vmatpush1.bf16.xpose.msra.mxu0 %v969
    %1097 = vmatprep.subr.bf16.mxu0 0
    %1098 = vmatpush1.bf16.xpose.msra.mxu0 0
    %1099 = vmatprep.subr.bf16.mxu0 0
    %1100 = vmatpush1.bf16.xpose.msra.mxu0 0
    %1101 = vmatprep.subr.bf16.mxu0 0
    %1102 = vmatpush1.bf16.xpose.msra.mxu0 0
    %1103 = vmatprep.subr.bf16.mxu0 0
    %1104 = vmatpush1.bf16.xpose.msra.mxu0 0
    %1105 = vmatprep.subr.bf16.mxu0 0
    %1106 = vmatpush1.bf16.xpose.msra.mxu0 0
    %1107 = vmatprep.subr.bf16.mxu0 0
    %1108 = vmatpush1.bf16.xpose.msra.mxu0 0
    %1109 = vmatprep.subr.bf16.mxu0 0
    %1110 = vmatpush1.bf16.xpose.msra.mxu0 0
    %1111 = vmatprep.subr.bf16.mxu0 0
    %1112 = vmatpush1.bf16.xpose.msra.mxu0 0
    %1113 = vmatprep.subr.bf16.mxu0 0
    %1114 = vmatpush1.bf16.xpose.msra.mxu0 0
    %1115 = vmatprep.subr.bf16.mxu0 0
    %1116 = vmatpush1.bf16.xpose.msra.mxu0 0
    %1117 = vmatprep.subr.bf16.mxu0 0
    %1118 = vmatpush1.bf16.xpose.msra.mxu0 0
    %1119 = vmatprep.subr.bf16.mxu0 0
    %1120 = vmatpush1.bf16.xpose.msra.mxu0 0
    %1121 = vmatprep.subr.bf16.mxu0 0
    %1122 = vmatpush1.bf16.xpose.msra.mxu0 0
    %1123 = vmatprep.subr.bf16.mxu0 0
    %1124 = vmatpush1.bf16.xpose.msra.mxu0 0
    %1125 = vmatprep.subr.bf16.mxu0 0
    %1126 = vmatpush1.bf16.xpose.msra.mxu0 0
    %1127 = vmatprep.mubr.bf16.mxu0 0
    %1128 = vmatmul.mubr.bf16.gmra.mrb[0].mxu0 %v1093
    %v1129 = vpop.f32.mrb[0].mxu0
    %v1130 = vadd.f32 0.0, %v1129
    %v1131 = vpop.f32.mrb[0].mxu0
    %v1132 = vpop.f32.mrb[0].mxu0
    %v1133 = vadd.f32 0.0, %v1132
    %v1134 = vpop.f32.mrb[0].mxu0
    %1135 = vdwg.mxu0
    %v1136 = vmul.f32 %v1130, 0.17677669
    %v1137 = vmul.f32 %v1133, 0.17677669
    %v1138 = vadd.f32 %v1136, %v443
    %v1139 = vadd.f32 %v1137, %v444
    %v1140 = vsel %vm497, %v1138, -inf
    %1141 = vmax.xlane.f32.xlu0 %v1140
    %v1142 = vpop.xlane.xlu0 %1141
    %v1143 = vsel %vm497, %v1139, -inf
    %1144 = vmax.xlane.f32.xlu0 %v1143
    %v1145 = vpop.xlane.xlu0 %1144
    %v1146 = vsub.f32 %v1138, %v1142
    %v1147 = vsub.f32 %v1139, %v1145
    %v1148 = vmul.f32 %v1146, 1.442695
    %v1149 = vpow.pop %v1148
    %v1150 = vmul.f32 %v1147, 1.442695
    %v1151 = vpow.pop %v1150
    %v1152 = vsel %vm497, %v1149, 0.0
    %1153 = vadd.xlane.f32.xlu0 %v1152
    %v1154 = vpop.xlane.xlu0 %1153
    %v1155 = vsel %vm497, %v1151, 0.0
    %1156 = vadd.xlane.f32.xlu0 %v1155
    %v1157 = vpop.xlane.xlu0 %1156
    %v1158 = vrcp.pop %v1154
    %v1159 = vrcp.pop %v1157
    %v1160 = vmul.f32 %v1149, %v1158
    %v1161 = vmul.f32 %v1151, %v1159
    %v1162 = vpack.c.bf16 %v1161, %v1160
    %v1164 = vsel %vm497, %v1162, 0
    %1166 = vmatprep.subr.bf16.mxu0 0
    %1167 = vmatpush1.bf16.msra.mxu0 %v1041
    %1168 = vmatprep.subr.bf16.mxu0 0
    %1169 = vmatpush1.bf16.msra.mxu0 0
    %1170 = vmatprep.subr.bf16.mxu0 0
    %1171 = vmatpush1.bf16.msra.mxu0 0
    %1172 = vmatprep.subr.bf16.mxu0 0
    %1173 = vmatpush1.bf16.msra.mxu0 0
    %1174 = vmatprep.subr.bf16.mxu0 0
    %1175 = vmatpush1.bf16.msra.mxu0 0
    %1176 = vmatprep.subr.bf16.mxu0 0
    %1177 = vmatpush1.bf16.msra.mxu0 0
    %1178 = vmatprep.subr.bf16.mxu0 0
    %1179 = vmatpush1.bf16.msra.mxu0 0
    %1180 = vmatprep.subr.bf16.mxu0 0
    %1181 = vmatpush1.bf16.msra.mxu0 0
    %1182 = vmatprep.subr.bf16.mxu0 0
    %1183 = vmatpush1.bf16.msra.mxu0 0
    %1184 = vmatprep.subr.bf16.mxu0 0
    %1185 = vmatpush1.bf16.msra.mxu0 0
    %1186 = vmatprep.subr.bf16.mxu0 0
    %1187 = vmatpush1.bf16.msra.mxu0 0
    %1188 = vmatprep.subr.bf16.mxu0 0
    %1189 = vmatpush1.bf16.msra.mxu0 0
    %1190 = vmatprep.subr.bf16.mxu0 0
    %1191 = vmatpush1.bf16.msra.mxu0 0
    %1192 = vmatprep.subr.bf16.mxu0 0
    %1193 = vmatpush1.bf16.msra.mxu0 0
    %1194 = vmatprep.subr.bf16.mxu0 0
    %1195 = vmatpush1.bf16.msra.mxu0 0
    %1196 = vmatprep.subr.bf16.mxu0 0
    %1197 = vmatpush1.bf16.msra.mxu0 0
    %1198 = vmatprep.mubr.bf16.mxu0 0
    %1199 = vmatmul.mubr.bf16.gmra.mrb[0].mxu0 %v1164
    %v1200 = vpop.f32.mrb[0].mxu0
    %v1201 = vadd.f32 0.0, %v1200
    %v1202 = vpop.f32.mrb[0].mxu0
    %v1203 = vpop.f32.mrb[0].mxu0
    %v1204 = vadd.f32 0.0, %v1203
    %v1205 = vpop.f32.mrb[0].mxu0
    %1206 = vdwg.mxu0
    %1209 = vrot.lane.b32.xlu0 %v1201, 32
    %v1210 = vpop.permute.xlu0 %1209
    %1211 = vrot.lane.b32.xlu0 %v1204, 32
    %v1212 = vpop.permute.xlu0 %1211
    %1215 = vst.msk [vmem:[#allocation2 + $0x10] sm:$0xff] %vm697, %v1210
    %1216 = vst.msk [vmem:[#allocation2 + $0x18] sm:$0xff] %vm697, %v1212
    %1217 = vrot.lane.b32.xlu0 %v431, 64
    %v1218 = vpop.permute.xlu0 %1217
    %1220 = vrot.lane.b32.xlu0 %v433, 96
    %v1221 = vpop.permute.xlu0 %1220
    %v1223 = vsel %vm445, %v1218, 0
    %v1226 = vsel %vm445, %v1221, 0
    %1228 = vmatprep.subr.bf16.mxu0 0
    %1229 = vmatpush1.bf16.xpose.msra.mxu0 %v1226
    %1230 = vmatprep.subr.bf16.mxu0 0
    %1231 = vmatpush1.bf16.xpose.msra.mxu0 0
    %1232 = vmatprep.subr.bf16.mxu0 0
    %1233 = vmatpush1.bf16.xpose.msra.mxu0 0
    %1234 = vmatprep.subr.bf16.mxu0 0
    %1235 = vmatpush1.bf16.xpose.msra.mxu0 0
    %1236 = vmatprep.subr.bf16.mxu0 0
    %1237 = vmatpush1.bf16.xpose.msra.mxu0 0
    %1238 = vmatprep.subr.bf16.mxu0 0
    %1239 = vmatpush1.bf16.xpose.msra.mxu0 0
    %1240 = vmatprep.subr.bf16.mxu0 0
    %1241 = vmatpush1.bf16.xpose.msra.mxu0 0
    %1242 = vmatprep.subr.bf16.mxu0 0
    %1243 = vmatpush1.bf16.xpose.msra.mxu0 0
    %1244 = vmatprep.subr.bf16.mxu0 0
    %1245 = vmatpush1.bf16.xpose.msra.mxu0 0
    %1246 = vmatprep.subr.bf16.mxu0 0
    %1247 = vmatpush1.bf16.xpose.msra.mxu0 0
    %1248 = vmatprep.subr.bf16.mxu0 0
    %1249 = vmatpush1.bf16.xpose.msra.mxu0 0
    %1250 = vmatprep.subr.bf16.mxu0 0
    %1251 = vmatpush1.bf16.xpose.msra.mxu0 0
    %1252 = vmatprep.subr.bf16.mxu0 0
    %1253 = vmatpush1.bf16.xpose.msra.mxu0 0
    %1254 = vmatprep.subr.bf16.mxu0 0
    %1255 = vmatpush1.bf16.xpose.msra.mxu0 0
    %1256 = vmatprep.subr.bf16.mxu0 0
    %1257 = vmatpush1.bf16.xpose.msra.mxu0 0
    %1258 = vmatprep.subr.bf16.mxu0 0
    %1259 = vmatpush1.bf16.xpose.msra.mxu0 0
    %1260 = vmatprep.mubr.bf16.mxu0 0
    %1261 = vmatmul.mubr.bf16.gmra.mrb[0].mxu0 %v1223
    %v1262 = vpop.f32.mrb[0].mxu0
    %v1263 = vadd.f32 0.0, %v1262
    %v1264 = vpop.f32.mrb[0].mxu0
    %v1265 = vpop.f32.mrb[0].mxu0
    %v1266 = vadd.f32 0.0, %v1265
    %v1267 = vpop.f32.mrb[0].mxu0
    %1268 = vdwg.mxu0
    %v1269 = vmul.f32 %v1263, 0.17677669
    %v1270 = vmul.f32 %v1266, 0.17677669
    %v1271 = vadd.f32 %v1269, %v443
    %v1272 = vadd.f32 %v1270, %v444
    %v1273 = vsel %vm497, %v1271, -inf
    %1274 = vmax.xlane.f32.xlu0 %v1273
    %v1275 = vpop.xlane.xlu0 %1274
    %v1276 = vsel %vm497, %v1272, -inf
    %1277 = vmax.xlane.f32.xlu0 %v1276
    %v1278 = vpop.xlane.xlu0 %1277
    %v1279 = vsub.f32 %v1271, %v1275
    %v1280 = vsub.f32 %v1272, %v1278
    %v1281 = vmul.f32 %v1279, 1.442695
    %v1282 = vpow.pop %v1281
    %v1283 = vmul.f32 %v1280, 1.442695
    %v1284 = vpow.pop %v1283
    %v1285 = vsel %vm497, %v1282, 0.0
    %1286 = vadd.xlane.f32.xlu0 %v1285
    %v1287 = vpop.xlane.xlu0 %1286
    %v1288 = vsel %vm497, %v1284, 0.0
    %1289 = vadd.xlane.f32.xlu0 %v1288
    %v1290 = vpop.xlane.xlu0 %1289
    %v1291 = vrcp.pop %v1287
    %v1292 = vrcp.pop %v1290
    %v1293 = vmul.f32 %v1282, %v1291
    %v1294 = vmul.f32 %v1284, %v1292
    %v1295 = vpack.c.bf16 %v1294, %v1293
    %1296 = vrot.lane.b32.xlu0 %v435, 32
    %v1297 = vpop.permute.xlu0 %1296
    %v1300 = vsel %vm497, %v1295, 0
    %1302 = vmatprep.subr.bf16.mxu0 0
    %1303 = vmatpush1.bf16.msra.mxu0 %v1297
    %1304 = vmatprep.subr.bf16.mxu0 0
    %1305 = vmatpush1.bf16.msra.mxu0 0
    %1306 = vmatprep.subr.bf16.mxu0 0
    %1307 = vmatpush1.bf16.msra.mxu0 0
    %1308 = vmatprep.subr.bf16.mxu0 0
    %1309 = vmatpush1.bf16.msra.mxu0 0
    %1310 = vmatprep.subr.bf16.mxu0 0
    %1311 = vmatpush1.bf16.msra.mxu0 0
    %1312 = vmatprep.subr.bf16.mxu0 0
    %1313 = vmatpush1.bf16.msra.mxu0 0
    %1314 = vmatprep.subr.bf16.mxu0 0
    %1315 = vmatpush1.bf16.msra.mxu0 0
    %1316 = vmatprep.subr.bf16.mxu0 0
    %1317 = vmatpush1.bf16.msra.mxu0 0
    %1318 = vmatprep.subr.bf16.mxu0 0
    %1319 = vmatpush1.bf16.msra.mxu0 0
    %1320 = vmatprep.subr.bf16.mxu0 0
    %1321 = vmatpush1.bf16.msra.mxu0 0
    %1322 = vmatprep.subr.bf16.mxu0 0
    %1323 = vmatpush1.bf16.msra.mxu0 0
    %1324 = vmatprep.subr.bf16.mxu0 0
    %1325 = vmatpush1.bf16.msra.mxu0 0
    %1326 = vmatprep.subr.bf16.mxu0 0
    %1327 = vmatpush1.bf16.msra.mxu0 0
    %1328 = vmatprep.subr.bf16.mxu0 0
    %1329 = vmatpush1.bf16.msra.mxu0 0
    %1330 = vmatprep.subr.bf16.mxu0 0
    %1331 = vmatpush1.bf16.msra.mxu0 0
    %1332 = vmatprep.subr.bf16.mxu0 0
    %1333 = vmatpush1.bf16.msra.mxu0 0
    %1334 = vmatprep.mubr.bf16.mxu0 0
    %1335 = vmatmul.mubr.bf16.gmra.mrb[0].mxu0 %v1300
    %v1336 = vpop.f32.mrb[0].mxu0
    %v1337 = vadd.f32 0.0, %v1336
    %v1338 = vpop.f32.mrb[0].mxu0
    %v1339 = vpop.f32.mrb[0].mxu0
    %v1340 = vadd.f32 0.0, %v1339
    %v1341 = vpop.f32.mrb[0].mxu0
    %1342 = vdwg.mxu0
    %1345 = vrot.lane.b32.xlu0 %v1337, 64
    %v1346 = vpop.permute.xlu0 %1345
    %1347 = vrot.lane.b32.xlu0 %v1340, 64
    %v1348 = vpop.permute.xlu0 %1347
    %1351 = vst.msk [vmem:[#allocation2 + $0x10] sm:$0xff] %vm834, %v1346
    %1352 = vst.msk [vmem:[#allocation2 + $0x18] sm:$0xff] %vm834, %v1348
    %1353 = vrot.lane.b32.xlu0 %v431, 32
    %v1354 = vpop.permute.xlu0 %1353
    %v1356 = vsel %vm445, %v1354, 0
    %1358 = vmatprep.subr.bf16.mxu0 0
    %1359 = vmatpush1.bf16.xpose.msra.mxu0 %v1226
    %1360 = vmatprep.subr.bf16.mxu0 0
    %1361 = vmatpush1.bf16.xpose.msra.mxu0 0
    %1362 = vmatprep.subr.bf16.mxu0 0
    %1363 = vmatpush1.bf16.xpose.msra.mxu0 0
    %1364 = vmatprep.subr.bf16.mxu0 0
    %1365 = vmatpush1.bf16.xpose.msra.mxu0 0
    %1366 = vmatprep.subr.bf16.mxu0 0
    %1367 = vmatpush1.bf16.xpose.msra.mxu0 0
    %1368 = vmatprep.subr.bf16.mxu0 0
    %1369 = vmatpush1.bf16.xpose.msra.mxu0 0
    %1370 = vmatprep.subr.bf16.mxu0 0
    %1371 = vmatpush1.bf16.xpose.msra.mxu0 0
    %1372 = vmatprep.subr.bf16.mxu0 0
    %1373 = vmatpush1.bf16.xpose.msra.mxu0 0
    %1374 = vmatprep.subr.bf16.mxu0 0
    %1375 = vmatpush1.bf16.xpose.msra.mxu0 0
    %1376 = vmatprep.subr.bf16.mxu0 0
    %1377 = vmatpush1.bf16.xpose.msra.mxu0 0
    %1378 = vmatprep.subr.bf16.mxu0 0
    %1379 = vmatpush1.bf16.xpose.msra.mxu0 0
    %1380 = vmatprep.subr.bf16.mxu0 0
    %1381 = vmatpush1.bf16.xpose.msra.mxu0 0
    %1382 = vmatprep.subr.bf16.mxu0 0
    %1383 = vmatpush1.bf16.xpose.msra.mxu0 0
    %1384 = vmatprep.subr.bf16.mxu0 0
    %1385 = vmatpush1.bf16.xpose.msra.mxu0 0
    %1386 = vmatprep.subr.bf16.mxu0 0
    %1387 = vmatpush1.bf16.xpose.msra.mxu0 0
    %1388 = vmatprep.subr.bf16.mxu0 0
    %1389 = vmatpush1.bf16.xpose.msra.mxu0 0
    %1390 = vmatprep.mubr.bf16.mxu0 0
    %1391 = vmatmul.mubr.bf16.gmra.mrb[0].mxu0 %v1356
    %v1392 = vpop.f32.mrb[0].mxu0
    %v1393 = vadd.f32 0.0, %v1392
    %v1394 = vpop.f32.mrb[0].mxu0
    %v1395 = vpop.f32.mrb[0].mxu0
    %v1396 = vadd.f32 0.0, %v1395
    %v1397 = vpop.f32.mrb[0].mxu0
    %1398 = vdwg.mxu0
    %v1399 = vmul.f32 %v1393, 0.17677669
    %v1400 = vmul.f32 %v1396, 0.17677669
    %v1401 = vadd.f32 %v1399, %v443
    %v1402 = vadd.f32 %v1400, %v444
    %v1403 = vsel %vm497, %v1401, -inf
    %1404 = vmax.xlane.f32.xlu0 %v1403
    %v1405 = vpop.xlane.xlu0 %1404
    %v1406 = vsel %vm497, %v1402, -inf
    %1407 = vmax.xlane.f32.xlu0 %v1406
    %v1408 = vpop.xlane.xlu0 %1407
    %v1409 = vsub.f32 %v1401, %v1405
    %v1410 = vsub.f32 %v1402, %v1408
    %v1411 = vmul.f32 %v1409, 1.442695
    %v1412 = vpow.pop %v1411
    %v1413 = vmul.f32 %v1410, 1.442695
    %v1414 = vpow.pop %v1413
    %v1415 = vsel %vm497, %v1412, 0.0
    %1416 = vadd.xlane.f32.xlu0 %v1415
    %v1417 = vpop.xlane.xlu0 %1416
    %v1418 = vsel %vm497, %v1414, 0.0
    %1419 = vadd.xlane.f32.xlu0 %v1418
    %v1420 = vpop.xlane.xlu0 %1419
    %v1421 = vrcp.pop %v1417
    %v1422 = vrcp.pop %v1420
    %v1423 = vmul.f32 %v1412, %v1421
    %v1424 = vmul.f32 %v1414, %v1422
    %v1425 = vpack.c.bf16 %v1424, %v1423
    %v1427 = vsel %vm497, %v1425, 0
    %1429 = vmatprep.subr.bf16.mxu0 0
    %1430 = vmatpush1.bf16.msra.mxu0 %v1297
    %1431 = vmatprep.subr.bf16.mxu0 0
    %1432 = vmatpush1.bf16.msra.mxu0 0
    %1433 = vmatprep.subr.bf16.mxu0 0
    %1434 = vmatpush1.bf16.msra.mxu0 0
    %1435 = vmatprep.subr.bf16.mxu0 0
    %1436 = vmatpush1.bf16.msra.mxu0 0
    %1437 = vmatprep.subr.bf16.mxu0 0
    %1438 = vmatpush1.bf16.msra.mxu0 0
    %1439 = vmatprep.subr.bf16.mxu0 0
    %1440 = vmatpush1.bf16.msra.mxu0 0
    %1441 = vmatprep.subr.bf16.mxu0 0
    %1442 = vmatpush1.bf16.msra.mxu0 0
    %1443 = vmatprep.subr.bf16.mxu0 0
    %1444 = vmatpush1.bf16.msra.mxu0 0
    %1445 = vmatprep.subr.bf16.mxu0 0
    %1446 = vmatpush1.bf16.msra.mxu0 0
    %1447 = vmatprep.subr.bf16.mxu0 0
    %1448 = vmatpush1.bf16.msra.mxu0 0
    %1449 = vmatprep.subr.bf16.mxu0 0
    %1450 = vmatpush1.bf16.msra.mxu0 0
    %1451 = vmatprep.subr.bf16.mxu0 0
    %1452 = vmatpush1.bf16.msra.mxu0 0
    %1453 = vmatprep.subr.bf16.mxu0 0
    %1454 = vmatpush1.bf16.msra.mxu0 0
    %1455 = vmatprep.subr.bf16.mxu0 0
    %1456 = vmatpush1.bf16.msra.mxu0 0
    %1457 = vmatprep.subr.bf16.mxu0 0
    %1458 = vmatpush1.bf16.msra.mxu0 0
    %1459 = vmatprep.subr.bf16.mxu0 0
    %1460 = vmatpush1.bf16.msra.mxu0 0
    %1461 = vmatprep.mubr.bf16.mxu0 0
    %1462 = vmatmul.mubr.bf16.gmra.mrb[0].mxu0 %v1427
    %v1463 = vpop.f32.mrb[0].mxu0
    %v1464 = vadd.f32 0.0, %v1463
    %v1465 = vpop.f32.mrb[0].mxu0
    %v1466 = vpop.f32.mrb[0].mxu0
    %v1467 = vadd.f32 0.0, %v1466
    %v1468 = vpop.f32.mrb[0].mxu0
    %1469 = vdwg.mxu0
    %1472 = vrot.lane.b32.xlu0 %v1464, 96
    %v1473 = vpop.permute.xlu0 %1472
    %1474 = vrot.lane.b32.xlu0 %v1467, 96
    %v1475 = vpop.permute.xlu0 %1474
    %1478 = vst.msk [vmem:[#allocation2 + $0x10] sm:$0xff] %vm962, %v1473
    %1479 = vst.msk [vmem:[#allocation2 + $0x18] sm:$0xff] %vm962, %v1475
    %v1480 = vld [vmem:[#allocation2] sm:$0xff]
    %v1481 = vld [vmem:[#allocation2 + $0x8] sm:$0xff]
    %v1482 = vld [vmem:[#allocation2 + $0x10] sm:$0xff]
    %v1483 = vld [vmem:[#allocation2 + $0x18] sm:$0xff]
    %v1484 = vpack.c.bf16 %v1481, %v1480
    %v1485 = vpack.c.bf16 %v1483, %v1482
    %v1486 = vld [vmem:[%s2] sm:$0xf]
    %v1487 = vld [vmem:[%s2 + $0x4] sm:$0xf]
    %v1488 = vld [vmem:[%s2 + $0x8] sm:$0xf]
    %v1489 = vld [vmem:[%s2 + $0xc] sm:$0xf]
    %v1490 = vld [vmem:[%s2 + $0x10] sm:$0xf]
    %v1491 = vld [vmem:[%s2 + $0x14] sm:$0xf]
    %v1492 = vld [vmem:[%s2 + $0x18] sm:$0xf]
    %v1493 = vld [vmem:[%s2 + $0x1c] sm:$0xf]
    %v1494 = vld [vmem:[%s2 + $0x20] sm:$0xf]
    %v1495 = vld [vmem:[%s2 + $0x24] sm:$0xf]
    %v1496 = vld [vmem:[%s2 + $0x28] sm:$0xf]
    %v1497 = vld [vmem:[%s2 + $0x2c] sm:$0xf]
    %v1498 = vld [vmem:[%s2 + $0x30] sm:$0xf]
    %v1499 = vld [vmem:[%s2 + $0x34] sm:$0xf]
    %v1500 = vld [vmem:[%s2 + $0x38] sm:$0xf]
    %v1501 = vld [vmem:[%s2 + $0x3c] sm:$0xf]
    %v1518 = vunpack.c.l.b16 %v1486
    %v1519 = vunpack.c.l.b16 %v1487
    %v1520 = vunpack.c.l.b16 %v1488
    %v1521 = vunpack.c.l.b16 %v1489
    %v1522 = vunpack.c.l.b16 %v1490
    %v1523 = vunpack.c.l.b16 %v1491
    %v1524 = vunpack.c.l.b16 %v1492
    %v1525 = vunpack.c.l.b16 %v1493
    %v1526 = vunpack.c.l.b16 %v1494
    %v1527 = vunpack.c.l.b16 %v1495
    %v1528 = vunpack.c.l.b16 %v1496
    %v1529 = vunpack.c.l.b16 %v1497
    %v1530 = vunpack.c.l.b16 %v1498
    %v1531 = vunpack.c.l.b16 %v1499
    %v1532 = vunpack.c.l.b16 %v1500
    %v1533 = vunpack.c.l.b16 %v1501
    %v1534 = vpack.c.b16 %v1519, %v1518
    %v1535 = vpack.c.b16 %v1521, %v1520
    %v1536 = vpack.c.b16 %v1523, %v1522
    %v1537 = vpack.c.b16 %v1525, %v1524
    %v1538 = vpack.c.b16 %v1527, %v1526
    %v1539 = vpack.c.b16 %v1529, %v1528
    %v1540 = vpack.c.b16 %v1531, %v1530
    %v1541 = vpack.c.b16 %v1533, %v1532
    %1550 = vmatprep.subr.bf16.mxu0 0
    %1551 = vmatpush1.bf16.msra.mxu0 %v1534
    %1552 = vmatprep.subr.bf16.mxu0 0
    %1553 = vmatpush1.bf16.msra.mxu0 %v1535
    %1554 = vmatprep.subr.bf16.mxu0 0
    %1555 = vmatpush1.bf16.msra.mxu0 %v1536
    %1556 = vmatprep.subr.bf16.mxu0 0
    %1557 = vmatpush1.bf16.msra.mxu0 %v1537
    %1558 = vmatprep.subr.bf16.mxu0 0
    %1559 = vmatpush1.bf16.msra.mxu0 %v1538
    %1560 = vmatprep.subr.bf16.mxu0 0
    %1561 = vmatpush1.bf16.msra.mxu0 %v1539
    %1562 = vmatprep.subr.bf16.mxu0 0
    %1563 = vmatpush1.bf16.msra.mxu0 %v1540
    %1564 = vmatprep.subr.bf16.mxu0 0
    %1565 = vmatpush1.bf16.msra.mxu0 %v1541
    %1566 = vmatprep.subr.bf16.mxu0 0
    %1567 = vmatpush1.bf16.msra.mxu0 0
    %1568 = vmatprep.subr.bf16.mxu0 0
    %1569 = vmatpush1.bf16.msra.mxu0 0
    %1570 = vmatprep.subr.bf16.mxu0 0
    %1571 = vmatpush1.bf16.msra.mxu0 0
    %1572 = vmatprep.subr.bf16.mxu0 0
    %1573 = vmatpush1.bf16.msra.mxu0 0
    %1574 = vmatprep.subr.bf16.mxu0 0
    %1575 = vmatpush1.bf16.msra.mxu0 0
    %1576 = vmatprep.subr.bf16.mxu0 0
    %1577 = vmatpush1.bf16.msra.mxu0 0
    %1578 = vmatprep.subr.bf16.mxu0 0
    %1579 = vmatpush1.bf16.msra.mxu0 0
    %1580 = vmatprep.subr.bf16.mxu0 0
    %1581 = vmatpush1.bf16.msra.mxu0 0
    %1582 = vmatprep.mubr.bf16.mxu0 0
    %1583 = vmatmul.mubr.bf16.gmra.mrb[0].mxu0 %v1484
    %v1584 = vpop.f32.mrb[0].mxu0
    %v1585 = vadd.f32 0.0, %v1584
    %v1586 = vpop.f32.mrb[0].mxu0
    %v1587 = vpop.f32.mrb[0].mxu0
    %v1588 = vadd.f32 0.0, %v1587
    %v1589 = vpop.f32.mrb[0].mxu0
    %1590 = vmatprep.mubr.bf16.mxu0 0
    %1591 = vmatmul.mubr.bf16.gmra.mrb[0].mxu0 %v1485
    %v1592 = vpop.f32.mrb[0].mxu0
    %v1593 = vadd.f32 0.0, %v1592
    %v1594 = vpop.f32.mrb[0].mxu0
    %v1595 = vpop.f32.mrb[0].mxu0
    %v1596 = vadd.f32 0.0, %v1595
    %v1597 = vpop.f32.mrb[0].mxu0
    %1598 = vdwg.mxu0
    %v1599 = vadd.f32 %v56, %v1585
    %v1600 = vadd.f32 %v57, %v1588
    %v1601 = vadd.f32 %v58, %v1593
    %v1602 = vadd.f32 %v59, %v1596
    %v1603 = vld [vmem:[%s5 + $0x1] sm:$0x1]
    %v1604 = vmul.f32 %v1599, %v1599
    %v1605 = vmul.f32 %v1600, %v1600
    %v1606 = vmul.f32 %v1601, %v1601
    %v1607 = vmul.f32 %v1602, %v1602
    %1608 = vadd.xlane.f32.xlu0 %v1604
    %v1609 = vpop.xlane.xlu0 %1608
    %1610 = vadd.xlane.f32.xlu0 %v1605
    %v1611 = vpop.xlane.xlu0 %1610
    %1612 = vadd.xlane.f32.xlu0 %v1606
    %v1613 = vpop.xlane.xlu0 %1612
    %1614 = vadd.xlane.f32.xlu0 %v1607
    %v1615 = vpop.xlane.xlu0 %1614
    %v1616 = vmul.f32 %v1609, %v73
    %v1617 = vmul.f32 %v1611, %v73
    %v1618 = vmul.f32 %v1613, %v73
    %v1619 = vmul.f32 %v1615, %v73
    %v1620 = vadd.f32 %v1616, 1e-05
    %v1621 = vadd.f32 %v1617, 1e-05
    %v1622 = vadd.f32 %v1618, 1e-05
    %v1623 = vadd.f32 %v1619, 1e-05
    %v1624 = vrsqrt.pop %v1620
    %v1625 = vrsqrt.pop %v1621
    %v1626 = vrsqrt.pop %v1622
    %v1627 = vrsqrt.pop %v1623
    %v1628 = vmul.f32 %v1599, %v1624
    %v1629 = vmul.f32 %v1600, %v1625
    %v1630 = vmul.f32 %v1601, %v1626
    %v1631 = vmul.f32 %v1602, %v1627
    %v1632 = vlaneseq
    %v1633 = vshrl.u32 %v1632, 7
    %v1634 = vsub.s32 0, %v1633
    %v1635 = vrot.slane %v1603, %v1634
    %v1636 = vmul.f32 %v1635, %v1628
    %v1637 = vmul.f32 %v1635, %v1629
    %v1638 = vmul.f32 %v1635, %v1630
    %v1639 = vmul.f32 %v1635, %v1631
    %v1640 = vpack.c.bf16 %v1637, %v1636
    %v1641 = vpack.c.bf16 %v1639, %v1638
    %v1642 = vld [vmem:[%s3] sm:$0xff]
    %v1643 = vld [vmem:[%s3 + $0x8] sm:$0xff]
    %v1644 = vld [vmem:[%s3 + $0x10] sm:$0xff]
    %v1645 = vld [vmem:[%s3 + $0x18] sm:$0xff]
    %v1646 = vld [vmem:[%s3 + $0x20] sm:$0xff]
    %v1647 = vld [vmem:[%s3 + $0x28] sm:$0xff]
    %v1648 = vld [vmem:[%s3 + $0x30] sm:$0xff]
    %v1649 = vld [vmem:[%s3 + $0x38] sm:$0xff]
    %v1650 = vld [vmem:[%s3 + $0x40] sm:$0xff]
    %v1651 = vld [vmem:[%s3 + $0x48] sm:$0xff]
    %v1652 = vld [vmem:[%s3 + $0x50] sm:$0xff]
    %v1653 = vld [vmem:[%s3 + $0x58] sm:$0xff]
    %v1654 = vld [vmem:[%s3 + $0x60] sm:$0xff]
    %v1655 = vld [vmem:[%s3 + $0x68] sm:$0xff]
    %v1656 = vld [vmem:[%s3 + $0x70] sm:$0xff]
    %v1657 = vld [vmem:[%s3 + $0x78] sm:$0xff]
    %v1658 = vld [vmem:[%s3 + $0x80] sm:$0xff]
    %v1659 = vld [vmem:[%s3 + $0x88] sm:$0xff]
    %v1660 = vld [vmem:[%s3 + $0x90] sm:$0xff]
    %v1661 = vld [vmem:[%s3 + $0x98] sm:$0xff]
    %v1662 = vld [vmem:[%s3 + $0xa0] sm:$0xff]
    %v1663 = vld [vmem:[%s3 + $0xa8] sm:$0xff]
    %v1664 = vld [vmem:[%s3 + $0xb0] sm:$0xff]
    %v1665 = vld [vmem:[%s3 + $0xb8] sm:$0xff]
    %v1666 = vld [vmem:[%s3 + $0xc0] sm:$0xff]
    %v1667 = vld [vmem:[%s3 + $0xc8] sm:$0xff]
    %v1668 = vld [vmem:[%s3 + $0xd0] sm:$0xff]
    %v1669 = vld [vmem:[%s3 + $0xd8] sm:$0xff]
    %v1670 = vld [vmem:[%s3 + $0xe0] sm:$0xff]
    %v1671 = vld [vmem:[%s3 + $0xe8] sm:$0xff]
    %v1672 = vld [vmem:[%s3 + $0xf0] sm:$0xff]
    %v1673 = vld [vmem:[%s3 + $0xf8] sm:$0xff]
    %v1674 = vld [vmem:[%s3 + $0x100] sm:$0xff]
    %v1675 = vld [vmem:[%s3 + $0x108] sm:$0xff]
    %v1676 = vld [vmem:[%s3 + $0x110] sm:$0xff]
    %v1677 = vld [vmem:[%s3 + $0x118] sm:$0xff]
    %v1678 = vld [vmem:[%s3 + $0x120] sm:$0xff]
    %v1679 = vld [vmem:[%s3 + $0x128] sm:$0xff]
    %v1680 = vld [vmem:[%s3 + $0x130] sm:$0xff]
    %v1681 = vld [vmem:[%s3 + $0x138] sm:$0xff]
    %v1682 = vld [vmem:[%s3 + $0x140] sm:$0xff]
    %v1683 = vld [vmem:[%s3 + $0x148] sm:$0xff]
    %v1684 = vld [vmem:[%s3 + $0x150] sm:$0xff]
    %v1685 = vld [vmem:[%s3 + $0x158] sm:$0xff]
    %v1686 = vld [vmem:[%s3 + $0x160] sm:$0xff]
    %v1687 = vld [vmem:[%s3 + $0x168] sm:$0xff]
    %v1688 = vld [vmem:[%s3 + $0x170] sm:$0xff]
    %v1689 = vld [vmem:[%s3 + $0x178] sm:$0xff]
    %v1738 = vunpack.c.l.b16 %v1642
    %v1739 = vunpack.c.h.b16 %v1642
    %v1740 = vunpack.c.l.b16 %v1643
    %v1741 = vunpack.c.h.b16 %v1643
    %v1742 = vunpack.c.l.b16 %v1644
    %v1743 = vunpack.c.h.b16 %v1644
    %v1744 = vunpack.c.l.b16 %v1645
    %v1745 = vunpack.c.h.b16 %v1645
    %v1746 = vunpack.c.l.b16 %v1646
    %v1747 = vunpack.c.h.b16 %v1646
    %v1748 = vunpack.c.l.b16 %v1647
    %v1749 = vunpack.c.h.b16 %v1647
    %v1750 = vunpack.c.l.b16 %v1648
    %v1751 = vunpack.c.h.b16 %v1648
    %v1752 = vunpack.c.l.b16 %v1649
    %v1753 = vunpack.c.h.b16 %v1649
    %v1754 = vunpack.c.l.b16 %v1650
    %v1755 = vunpack.c.h.b16 %v1650
    %v1756 = vunpack.c.l.b16 %v1651
    %v1757 = vunpack.c.h.b16 %v1651
    %v1758 = vunpack.c.l.b16 %v1652
    %v1759 = vunpack.c.h.b16 %v1652
    %v1760 = vunpack.c.l.b16 %v1653
    %v1761 = vunpack.c.h.b16 %v1653
    %v1762 = vunpack.c.l.b16 %v1654
    %v1763 = vunpack.c.h.b16 %v1654
    %v1764 = vunpack.c.l.b16 %v1655
    %v1765 = vunpack.c.h.b16 %v1655
    %v1766 = vunpack.c.l.b16 %v1656
    %v1767 = vunpack.c.h.b16 %v1656
    %v1768 = vunpack.c.l.b16 %v1657
    %v1769 = vunpack.c.h.b16 %v1657
    %v1770 = vunpack.c.l.b16 %v1658
    %v1771 = vunpack.c.h.b16 %v1658
    %v1772 = vunpack.c.l.b16 %v1659
    %v1773 = vunpack.c.h.b16 %v1659
    %v1774 = vunpack.c.l.b16 %v1660
    %v1775 = vunpack.c.h.b16 %v1660
    %v1776 = vunpack.c.l.b16 %v1661
    %v1777 = vunpack.c.h.b16 %v1661
    %v1778 = vunpack.c.l.b16 %v1662
    %v1779 = vunpack.c.h.b16 %v1662
    %v1780 = vunpack.c.l.b16 %v1663
    %v1781 = vunpack.c.h.b16 %v1663
    %v1782 = vunpack.c.l.b16 %v1664
    %v1783 = vunpack.c.h.b16 %v1664
    %v1784 = vunpack.c.l.b16 %v1665
    %v1785 = vunpack.c.h.b16 %v1665
    %v1786 = vunpack.c.l.b16 %v1666
    %v1787 = vunpack.c.h.b16 %v1666
    %v1788 = vunpack.c.l.b16 %v1667
    %v1789 = vunpack.c.h.b16 %v1667
    %v1790 = vunpack.c.l.b16 %v1668
    %v1791 = vunpack.c.h.b16 %v1668
    %v1792 = vunpack.c.l.b16 %v1669
    %v1793 = vunpack.c.h.b16 %v1669
    %v1794 = vunpack.c.l.b16 %v1670
    %v1795 = vunpack.c.h.b16 %v1670
    %v1796 = vunpack.c.l.b16 %v1671
    %v1797 = vunpack.c.h.b16 %v1671
    %v1798 = vunpack.c.l.b16 %v1672
    %v1799 = vunpack.c.h.b16 %v1672
    %v1800 = vunpack.c.l.b16 %v1673
    %v1801 = vunpack.c.h.b16 %v1673
    %v1802 = vunpack.c.l.b16 %v1674
    %v1803 = vunpack.c.h.b16 %v1674
    %v1804 = vunpack.c.l.b16 %v1675
    %v1805 = vunpack.c.h.b16 %v1675
    %v1806 = vunpack.c.l.b16 %v1676
    %v1807 = vunpack.c.h.b16 %v1676
    %v1808 = vunpack.c.l.b16 %v1677
    %v1809 = vunpack.c.h.b16 %v1677
    %v1810 = vunpack.c.l.b16 %v1678
    %v1811 = vunpack.c.h.b16 %v1678
    %v1812 = vunpack.c.l.b16 %v1679
    %v1813 = vunpack.c.h.b16 %v1679
    %v1814 = vunpack.c.l.b16 %v1680
    %v1815 = vunpack.c.h.b16 %v1680
    %v1816 = vunpack.c.l.b16 %v1681
    %v1817 = vunpack.c.h.b16 %v1681
    %v1818 = vunpack.c.l.b16 %v1682
    %v1819 = vunpack.c.h.b16 %v1682
    %v1820 = vunpack.c.l.b16 %v1683
    %v1821 = vunpack.c.h.b16 %v1683
    %v1822 = vunpack.c.l.b16 %v1684
    %v1823 = vunpack.c.h.b16 %v1684
    %v1824 = vunpack.c.l.b16 %v1685
    %v1825 = vunpack.c.h.b16 %v1685
    %v1826 = vunpack.c.l.b16 %v1686
    %v1827 = vunpack.c.h.b16 %v1686
    %v1828 = vunpack.c.l.b16 %v1687
    %v1829 = vunpack.c.h.b16 %v1687
    %v1830 = vunpack.c.l.b16 %v1688
    %v1831 = vunpack.c.h.b16 %v1688
    %v1832 = vunpack.c.l.b16 %v1689
    %v1833 = vunpack.c.h.b16 %v1689
    %v1834 = vpack.c.b16 %v1744, %v1738
    %v1835 = vpack.c.b16 %v1745, %v1739
    %v1836 = vpack.c.b16 %v1746, %v1740
    %v1837 = vpack.c.b16 %v1747, %v1741
    %v1838 = vpack.c.b16 %v1748, %v1742
    %v1839 = vpack.c.b16 %v1749, %v1743
    %v1840 = vpack.c.b16 %v1756, %v1750
    %v1841 = vpack.c.b16 %v1757, %v1751
    %v1842 = vpack.c.b16 %v1758, %v1752
    %v1843 = vpack.c.b16 %v1759, %v1753
    %v1844 = vpack.c.b16 %v1760, %v1754
    %v1845 = vpack.c.b16 %v1761, %v1755
    %v1846 = vpack.c.b16 %v1768, %v1762
    %v1847 = vpack.c.b16 %v1769, %v1763
    %v1848 = vpack.c.b16 %v1770, %v1764
    %v1849 = vpack.c.b16 %v1771, %v1765
    %v1850 = vpack.c.b16 %v1772, %v1766
    %v1851 = vpack.c.b16 %v1773, %v1767
    %v1852 = vpack.c.b16 %v1780, %v1774
    %v1853 = vpack.c.b16 %v1781, %v1775
    %v1854 = vpack.c.b16 %v1782, %v1776
    %v1855 = vpack.c.b16 %v1783, %v1777
    %v1856 = vpack.c.b16 %v1784, %v1778
    %v1857 = vpack.c.b16 %v1785, %v1779
    %v1858 = vpack.c.b16 %v1792, %v1786
    %v1859 = vpack.c.b16 %v1793, %v1787
    %v1860 = vpack.c.b16 %v1794, %v1788
    %v1861 = vpack.c.b16 %v1795, %v1789
    %v1862 = vpack.c.b16 %v1796, %v1790
    %v1863 = vpack.c.b16 %v1797, %v1791
    %v1864 = vpack.c.b16 %v1804, %v1798
    %v1865 = vpack.c.b16 %v1805, %v1799
    %v1866 = vpack.c.b16 %v1806, %v1800
    %v1867 = vpack.c.b16 %v1807, %v1801
    %v1868 = vpack.c.b16 %v1808, %v1802
    %v1869 = vpack.c.b16 %v1809, %v1803
    %v1870 = vpack.c.b16 %v1816, %v1810
    %v1871 = vpack.c.b16 %v1817, %v1811
    %v1872 = vpack.c.b16 %v1818, %v1812
    %v1873 = vpack.c.b16 %v1819, %v1813
    %v1874 = vpack.c.b16 %v1820, %v1814
    %v1875 = vpack.c.b16 %v1821, %v1815
    %v1876 = vpack.c.b16 %v1828, %v1822
    %v1877 = vpack.c.b16 %v1829, %v1823
    %v1878 = vpack.c.b16 %v1830, %v1824
    %v1879 = vpack.c.b16 %v1831, %v1825
    %v1880 = vpack.c.b16 %v1832, %v1826
    %v1881 = vpack.c.b16 %v1833, %v1827
    %1930 = vmatprep.subr.bf16.mxu0 %v1835
    %1931 = vmatpush1.bf16.msra.mxu0 %v1834
    %1932 = vmatprep.subr.bf16.mxu0 %v1841
    %1933 = vmatpush1.bf16.msra.mxu0 %v1840
    %1934 = vmatprep.subr.bf16.mxu0 %v1847
    %1935 = vmatpush1.bf16.msra.mxu0 %v1846
    %1936 = vmatprep.subr.bf16.mxu0 %v1853
    %1937 = vmatpush1.bf16.msra.mxu0 %v1852
    %1938 = vmatprep.subr.bf16.mxu0 %v1859
    %1939 = vmatpush1.bf16.msra.mxu0 %v1858
    %1940 = vmatprep.subr.bf16.mxu0 %v1865
    %1941 = vmatpush1.bf16.msra.mxu0 %v1864
    %1942 = vmatprep.subr.bf16.mxu0 %v1871
    %1943 = vmatpush1.bf16.msra.mxu0 %v1870
    %1944 = vmatprep.subr.bf16.mxu0 %v1877
    %1945 = vmatpush1.bf16.msra.mxu0 %v1876
    %1946 = vmatprep.subr.bf16.mxu0 0
    %1947 = vmatpush1.bf16.msra.mxu0 0
    %1948 = vmatprep.subr.bf16.mxu0 0
    %1949 = vmatpush1.bf16.msra.mxu0 0
    %1950 = vmatprep.subr.bf16.mxu0 0
    %1951 = vmatpush1.bf16.msra.mxu0 0
    %1952 = vmatprep.subr.bf16.mxu0 0
    %1953 = vmatpush1.bf16.msra.mxu0 0
    %1954 = vmatprep.subr.bf16.mxu0 0
    %1955 = vmatpush1.bf16.msra.mxu0 0
    %1956 = vmatprep.subr.bf16.mxu0 0
    %1957 = vmatpush1.bf16.msra.mxu0 0
    %1958 = vmatprep.subr.bf16.mxu0 0
    %1959 = vmatpush1.bf16.msra.mxu0 0
    %1960 = vmatprep.subr.bf16.mxu0 0
    %1961 = vmatpush1.bf16.msra.mxu0 0
    %1962 = vmatprep.mubr.bf16.mxu0 0
    %1963 = vmatmul.mubr.bf16.gmra.mrb[0].mxu0 %v1640
    %v1964 = vpop.f32.mrb[0].mxu0
    %v1965 = vadd.f32 0.0, %v1964
    %v1966 = vpop.f32.mrb[0].mxu0
    %v1967 = vadd.f32 0.0, %v1966
    %v1968 = vpop.f32.mrb[0].mxu0
    %v1969 = vadd.f32 0.0, %v1968
    %v1970 = vpop.f32.mrb[0].mxu0
    %v1971 = vadd.f32 0.0, %v1970
    %1972 = vmatprep.mubr.bf16.mxu0 0
    %1973 = vmatmul.mubr.bf16.gmra.mrb[0].mxu0 %v1641
    %v1974 = vpop.f32.mrb[0].mxu0
    %v1975 = vadd.f32 0.0, %v1974
    %v1976 = vpop.f32.mrb[0].mxu0
    %v1977 = vadd.f32 0.0, %v1976
    %v1978 = vpop.f32.mrb[0].mxu0
    %v1979 = vadd.f32 0.0, %v1978
    %v1980 = vpop.f32.mrb[0].mxu0
    %v1981 = vadd.f32 0.0, %v1980
    %1982 = vdwg.mxu0
    %1983 = vmatprep.subr.bf16.mxu0 %v1837
    %1984 = vmatpush1.bf16.msra.mxu0 %v1836
    %1985 = vmatprep.subr.bf16.mxu0 %v1843
    %1986 = vmatpush1.bf16.msra.mxu0 %v1842
    %1987 = vmatprep.subr.bf16.mxu0 %v1849
    %1988 = vmatpush1.bf16.msra.mxu0 %v1848
    %1989 = vmatprep.subr.bf16.mxu0 %v1855
    %1990 = vmatpush1.bf16.msra.mxu0 %v1854
    %1991 = vmatprep.subr.bf16.mxu0 %v1861
    %1992 = vmatpush1.bf16.msra.mxu0 %v1860
    %1993 = vmatprep.subr.bf16.mxu0 %v1867
    %1994 = vmatpush1.bf16.msra.mxu0 %v1866
    %1995 = vmatprep.subr.bf16.mxu0 %v1873
    %1996 = vmatpush1.bf16.msra.mxu0 %v1872
    %1997 = vmatprep.subr.bf16.mxu0 %v1879
    %1998 = vmatpush1.bf16.msra.mxu0 %v1878
    %1999 = vmatprep.subr.bf16.mxu0 0
    %2000 = vmatpush1.bf16.msra.mxu0 0
    %2001 = vmatprep.subr.bf16.mxu0 0
    %2002 = vmatpush1.bf16.msra.mxu0 0
    %2003 = vmatprep.subr.bf16.mxu0 0
    %2004 = vmatpush1.bf16.msra.mxu0 0
    %2005 = vmatprep.subr.bf16.mxu0 0
    %2006 = vmatpush1.bf16.msra.mxu0 0
    %2007 = vmatprep.subr.bf16.mxu0 0
    %2008 = vmatpush1.bf16.msra.mxu0 0
    %2009 = vmatprep.subr.bf16.mxu0 0
    %2010 = vmatpush1.bf16.msra.mxu0 0
    %2011 = vmatprep.subr.bf16.mxu0 0
    %2012 = vmatpush1.bf16.msra.mxu0 0
    %2013 = vmatprep.subr.bf16.mxu0 0
    %2014 = vmatpush1.bf16.msra.mxu0 0
    %2015 = vmatprep.mubr.bf16.mxu0 0
    %2016 = vmatmul.mubr.bf16.gmra.mrb[0].mxu0 %v1640
    %v2017 = vpop.f32.mrb[0].mxu0
    %v2018 = vadd.f32 0.0, %v2017
    %v2019 = vpop.f32.mrb[0].mxu0
    %v2020 = vadd.f32 0.0, %v2019
    %v2021 = vpop.f32.mrb[0].mxu0
    %v2022 = vadd.f32 0.0, %v2021
    %v2023 = vpop.f32.mrb[0].mxu0
    %v2024 = vadd.f32 0.0, %v2023
    %2025 = vmatprep.mubr.bf16.mxu0 0
    %2026 = vmatmul.mubr.bf16.gmra.mrb[0].mxu0 %v1641
    %v2027 = vpop.f32.mrb[0].mxu0
    %v2028 = vadd.f32 0.0, %v2027
    %v2029 = vpop.f32.mrb[0].mxu0
    %v2030 = vadd.f32 0.0, %v2029
    %v2031 = vpop.f32.mrb[0].mxu0
    %v2032 = vadd.f32 0.0, %v2031
    %v2033 = vpop.f32.mrb[0].mxu0
    %v2034 = vadd.f32 0.0, %v2033
    %2035 = vdwg.mxu0
    %2036 = vmatprep.subr.bf16.mxu0 %v1839
    %2037 = vmatpush1.bf16.msra.mxu0 %v1838
    %2038 = vmatprep.subr.bf16.mxu0 %v1845
    %2039 = vmatpush1.bf16.msra.mxu0 %v1844
    %2040 = vmatprep.subr.bf16.mxu0 %v1851
    %2041 = vmatpush1.bf16.msra.mxu0 %v1850
    %2042 = vmatprep.subr.bf16.mxu0 %v1857
    %2043 = vmatpush1.bf16.msra.mxu0 %v1856
    %2044 = vmatprep.subr.bf16.mxu0 %v1863
    %2045 = vmatpush1.bf16.msra.mxu0 %v1862
    %2046 = vmatprep.subr.bf16.mxu0 %v1869
    %2047 = vmatpush1.bf16.msra.mxu0 %v1868
    %2048 = vmatprep.subr.bf16.mxu0 %v1875
    %2049 = vmatpush1.bf16.msra.mxu0 %v1874
    %2050 = vmatprep.subr.bf16.mxu0 %v1881
    %2051 = vmatpush1.bf16.msra.mxu0 %v1880
    %2052 = vmatprep.subr.bf16.mxu0 0
    %2053 = vmatpush1.bf16.msra.mxu0 0
    %2054 = vmatprep.subr.bf16.mxu0 0
    %2055 = vmatpush1.bf16.msra.mxu0 0
    %2056 = vmatprep.subr.bf16.mxu0 0
    %2057 = vmatpush1.bf16.msra.mxu0 0
    %2058 = vmatprep.subr.bf16.mxu0 0
    %2059 = vmatpush1.bf16.msra.mxu0 0
    %2060 = vmatprep.subr.bf16.mxu0 0
    %2061 = vmatpush1.bf16.msra.mxu0 0
    %2062 = vmatprep.subr.bf16.mxu0 0
    %2063 = vmatpush1.bf16.msra.mxu0 0
    %2064 = vmatprep.subr.bf16.mxu0 0
    %2065 = vmatpush1.bf16.msra.mxu0 0
    %2066 = vmatprep.subr.bf16.mxu0 0
    %2067 = vmatpush1.bf16.msra.mxu0 0
    %2068 = vmatprep.mubr.bf16.mxu0 0
    %2069 = vmatmul.mubr.bf16.gmra.mrb[0].mxu0 %v1640
    %v2070 = vpop.f32.mrb[0].mxu0
    %v2071 = vadd.f32 0.0, %v2070
    %v2072 = vpop.f32.mrb[0].mxu0
    %v2073 = vadd.f32 0.0, %v2072
    %v2074 = vpop.f32.mrb[0].mxu0
    %v2075 = vadd.f32 0.0, %v2074
    %v2076 = vpop.f32.mrb[0].mxu0
    %v2077 = vadd.f32 0.0, %v2076
    %2078 = vmatprep.mubr.bf16.mxu0 0
    %2079 = vmatmul.mubr.bf16.gmra.mrb[0].mxu0 %v1641
    %v2080 = vpop.f32.mrb[0].mxu0
    %v2081 = vadd.f32 0.0, %v2080
    %v2082 = vpop.f32.mrb[0].mxu0
    %v2083 = vadd.f32 0.0, %v2082
    %v2084 = vpop.f32.mrb[0].mxu0
    %v2085 = vadd.f32 0.0, %v2084
    %v2086 = vpop.f32.mrb[0].mxu0
    %v2087 = vadd.f32 0.0, %v2086
    %2088 = vdwg.mxu0
    %v2089 = vmul.f32 %v1965, %v2020
    %v2090 = vmul.f32 %v1967, %v2071
    %v2091 = vmul.f32 %v2018, %v2073
    %v2092 = vmul.f32 %v1969, %v2024
    %v2093 = vmul.f32 %v1971, %v2075
    %v2094 = vmul.f32 %v2022, %v2077
    %v2095 = vmul.f32 %v1975, %v2030
    %v2096 = vmul.f32 %v1977, %v2081
    %v2097 = vmul.f32 %v2028, %v2083
    %v2098 = vmul.f32 %v1979, %v2034
    %v2099 = vmul.f32 %v1981, %v2085
    %v2100 = vmul.f32 %v2032, %v2087
    %v2101 = vxor.u32 %v2089, 2147483648
    %v2102 = vxor.u32 %v2090, 2147483648
    %v2103 = vxor.u32 %v2091, 2147483648
    %v2104 = vxor.u32 %v2092, 2147483648
    %v2105 = vxor.u32 %v2093, 2147483648
    %v2106 = vxor.u32 %v2094, 2147483648
    %v2107 = vxor.u32 %v2095, 2147483648
    %v2108 = vxor.u32 %v2096, 2147483648
    %v2109 = vxor.u32 %v2097, 2147483648
    %v2110 = vxor.u32 %v2098, 2147483648
    %v2111 = vxor.u32 %v2099, 2147483648
    %v2112 = vxor.u32 %v2100, 2147483648
    %v2113 = vmul.f32 %v2101, 1.442695
    %v2114 = vpow.pop %v2113
    %v2115 = vmul.f32 %v2102, 1.442695
    %v2116 = vpow.pop %v2115
    %v2117 = vmul.f32 %v2103, 1.442695
    %v2118 = vpow.pop %v2117
    %v2119 = vmul.f32 %v2104, 1.442695
    %v2120 = vpow.pop %v2119
    %v2121 = vmul.f32 %v2105, 1.442695
    %v2122 = vpow.pop %v2121
    %v2123 = vmul.f32 %v2106, 1.442695
    %v2124 = vpow.pop %v2123
    %v2125 = vmul.f32 %v2107, 1.442695
    %v2126 = vpow.pop %v2125
    %v2127 = vmul.f32 %v2108, 1.442695
    %v2128 = vpow.pop %v2127
    %v2129 = vmul.f32 %v2109, 1.442695
    %v2130 = vpow.pop %v2129
    %v2131 = vmul.f32 %v2110, 1.442695
    %v2132 = vpow.pop %v2131
    %v2133 = vmul.f32 %v2111, 1.442695
    %v2134 = vpow.pop %v2133
    %v2135 = vmul.f32 %v2112, 1.442695
    %v2136 = vpow.pop %v2135
    %v2137 = vadd.f32 %v2114, 1.0
    %v2138 = vadd.f32 %v2116, 1.0
    %v2139 = vadd.f32 %v2118, 1.0
    %v2140 = vadd.f32 %v2120, 1.0
    %v2141 = vadd.f32 %v2122, 1.0
    %v2142 = vadd.f32 %v2124, 1.0
    %v2143 = vadd.f32 %v2126, 1.0
    %v2144 = vadd.f32 %v2128, 1.0
    %v2145 = vadd.f32 %v2130, 1.0
    %v2146 = vadd.f32 %v2132, 1.0
    %v2147 = vadd.f32 %v2134, 1.0
    %v2148 = vadd.f32 %v2136, 1.0
    %v2149 = vrcp.pop %v2137
    %v2150 = vmul.f32 1.0, %v2149
    %v2151 = vrcp.pop %v2138
    %v2152 = vmul.f32 1.0, %v2151
    %v2153 = vrcp.pop %v2139
    %v2154 = vmul.f32 1.0, %v2153
    %v2155 = vrcp.pop %v2140
    %v2156 = vmul.f32 1.0, %v2155
    %v2157 = vrcp.pop %v2141
    %v2158 = vmul.f32 1.0, %v2157
    %v2159 = vrcp.pop %v2142
    %v2160 = vmul.f32 1.0, %v2159
    %v2161 = vrcp.pop %v2143
    %v2162 = vmul.f32 1.0, %v2161
    %v2163 = vrcp.pop %v2144
    %v2164 = vmul.f32 1.0, %v2163
    %v2165 = vrcp.pop %v2145
    %v2166 = vmul.f32 1.0, %v2165
    %v2167 = vrcp.pop %v2146
    %v2168 = vmul.f32 1.0, %v2167
    %v2169 = vrcp.pop %v2147
    %v2170 = vmul.f32 1.0, %v2169
    %v2171 = vrcp.pop %v2148
    %v2172 = vmul.f32 1.0, %v2171
    %v2173 = vmul.f32 %v2089, %v2150
    %v2174 = vmul.f32 %v2090, %v2152
    %v2175 = vmul.f32 %v2091, %v2154
    %v2176 = vmul.f32 %v2092, %v2156
    %v2177 = vmul.f32 %v2093, %v2158
    %v2178 = vmul.f32 %v2094, %v2160
    %v2179 = vmul.f32 %v2095, %v2162
    %v2180 = vmul.f32 %v2096, %v2164
    %v2181 = vmul.f32 %v2097, %v2166
    %v2182 = vmul.f32 %v2098, %v2168
    %v2183 = vmul.f32 %v2099, %v2170
    %v2184 = vmul.f32 %v2100, %v2172
    %v2185 = vpack.c.bf16 %v2176, %v2173
    %v2186 = vpack.c.bf16 %v2177, %v2174
    %v2187 = vpack.c.bf16 %v2178, %v2175
    %v2188 = vpack.c.bf16 %v2182, %v2179
    %v2189 = vpack.c.bf16 %v2183, %v2180
    %v2190 = vpack.c.bf16 %v2184, %v2181
    %v2191 = vld [vmem:[#allocation3] sm:$0xf]
    %v2192 = vld [vmem:[#allocation3 + $0x4] sm:$0xf]
    %v2193 = vld [vmem:[#allocation3 + $0x8] sm:$0xf]
    %v2194 = vld [vmem:[#allocation3 + $0xc] sm:$0xf]
    %v2195 = vld [vmem:[#allocation3 + $0x10] sm:$0xf]
    %v2196 = vld [vmem:[#allocation3 + $0x14] sm:$0xf]
    %v2197 = vld [vmem:[#allocation3 + $0x18] sm:$0xf]
    %v2198 = vld [vmem:[#allocation3 + $0x1c] sm:$0xf]
    %v2199 = vld [vmem:[#allocation3 + $0x20] sm:$0xf]
    %v2200 = vld [vmem:[#allocation3 + $0x24] sm:$0xf]
    %v2201 = vld [vmem:[#allocation3 + $0x28] sm:$0xf]
    %v2202 = vld [vmem:[#allocation3 + $0x2c] sm:$0xf]
    %v2203 = vld [vmem:[#allocation3 + $0x30] sm:$0xf]
    %v2204 = vld [vmem:[#allocation3 + $0x34] sm:$0xf]
    %v2205 = vld [vmem:[#allocation3 + $0x38] sm:$0xf]
    %v2206 = vld [vmem:[#allocation3 + $0x3c] sm:$0xf]
    %v2207 = vld [vmem:[#allocation3 + $0x40] sm:$0xf]
    %v2208 = vld [vmem:[#allocation3 + $0x44] sm:$0xf]
    %v2209 = vld [vmem:[#allocation3 + $0x48] sm:$0xf]
    %v2210 = vld [vmem:[#allocation3 + $0x4c] sm:$0xf]
    %v2211 = vld [vmem:[#allocation3 + $0x50] sm:$0xf]
    %v2212 = vld [vmem:[#allocation3 + $0x54] sm:$0xf]
    %v2213 = vld [vmem:[#allocation3 + $0x58] sm:$0xf]
    %v2214 = vld [vmem:[#allocation3 + $0x5c] sm:$0xf]
    %v2215 = vld [vmem:[#allocation3 + $0x60] sm:$0xf]
    %v2216 = vld [vmem:[#allocation3 + $0x64] sm:$0xf]
    %v2217 = vld [vmem:[#allocation3 + $0x68] sm:$0xf]
    %v2218 = vld [vmem:[#allocation3 + $0x6c] sm:$0xf]
    %v2219 = vld [vmem:[#allocation3 + $0x70] sm:$0xf]
    %v2220 = vld [vmem:[#allocation3 + $0x74] sm:$0xf]
    %v2221 = vld [vmem:[#allocation3 + $0x78] sm:$0xf]
    %v2222 = vld [vmem:[#allocation3 + $0x7c] sm:$0xf]
    %v2223 = vld [vmem:[#allocation3 + $0x80] sm:$0xf]
    %v2224 = vld [vmem:[#allocation3 + $0x84] sm:$0xf]
    %v2225 = vld [vmem:[#allocation3 + $0x88] sm:$0xf]
    %v2226 = vld [vmem:[#allocation3 + $0x8c] sm:$0xf]
    %v2227 = vld [vmem:[#allocation3 + $0x90] sm:$0xf]
    %v2228 = vld [vmem:[#allocation3 + $0x94] sm:$0xf]
    %v2229 = vld [vmem:[#allocation3 + $0x98] sm:$0xf]
    %v2230 = vld [vmem:[#allocation3 + $0x9c] sm:$0xf]
    %v2231 = vld [vmem:[#allocation3 + $0xa0] sm:$0xf]
    %v2232 = vld [vmem:[#allocation3 + $0xa4] sm:$0xf]
    %v2233 = vld [vmem:[#allocation3 + $0xa8] sm:$0xf]
    %v2234 = vld [vmem:[#allocation3 + $0xac] sm:$0xf]
    %v2235 = vld [vmem:[#allocation3 + $0xb0] sm:$0xf]
    %v2236 = vld [vmem:[#allocation3 + $0xb4] sm:$0xf]
    %v2237 = vld [vmem:[#allocation3 + $0xb8] sm:$0xf]
    %v2238 = vld [vmem:[#allocation3 + $0xbc] sm:$0xf]
    %v2287 = vunpack.c.l.b16 %v2191
    %v2288 = vunpack.c.l.b16 %v2192
    %v2289 = vunpack.c.l.b16 %v2193
    %v2290 = vunpack.c.l.b16 %v2194
    %v2291 = vunpack.c.l.b16 %v2195
    %v2292 = vunpack.c.l.b16 %v2196
    %v2293 = vunpack.c.l.b16 %v2197
    %v2294 = vunpack.c.l.b16 %v2198
    %v2295 = vunpack.c.l.b16 %v2199
    %v2296 = vunpack.c.l.b16 %v2200
    %v2297 = vunpack.c.l.b16 %v2201
    %v2298 = vunpack.c.l.b16 %v2202
    %v2299 = vunpack.c.l.b16 %v2203
    %v2300 = vunpack.c.l.b16 %v2204
    %v2301 = vunpack.c.l.b16 %v2205
    %v2302 = vunpack.c.l.b16 %v2206
    %v2303 = vunpack.c.l.b16 %v2207
    %v2304 = vunpack.c.l.b16 %v2208
    %v2305 = vunpack.c.l.b16 %v2209
    %v2306 = vunpack.c.l.b16 %v2210
    %v2307 = vunpack.c.l.b16 %v2211
    %v2308 = vunpack.c.l.b16 %v2212
    %v2309 = vunpack.c.l.b16 %v2213
    %v2310 = vunpack.c.l.b16 %v2214
    %v2311 = vunpack.c.l.b16 %v2215
    %v2312 = vunpack.c.l.b16 %v2216
    %v2313 = vunpack.c.l.b16 %v2217
    %v2314 = vunpack.c.l.b16 %v2218
    %v2315 = vunpack.c.l.b16 %v2219
    %v2316 = vunpack.c.l.b16 %v2220
    %v2317 = vunpack.c.l.b16 %v2221
    %v2318 = vunpack.c.l.b16 %v2222
    %v2319 = vunpack.c.l.b16 %v2223
    %v2320 = vunpack.c.l.b16 %v2224
    %v2321 = vunpack.c.l.b16 %v2225
    %v2322 = vunpack.c.l.b16 %v2226
    %v2323 = vunpack.c.l.b16 %v2227
    %v2324 = vunpack.c.l.b16 %v2228
    %v2325 = vunpack.c.l.b16 %v2229
    %v2326 = vunpack.c.l.b16 %v2230
    %v2327 = vunpack.c.l.b16 %v2231
    %v2328 = vunpack.c.l.b16 %v2232
    %v2329 = vunpack.c.l.b16 %v2233
    %v2330 = vunpack.c.l.b16 %v2234
    %v2331 = vunpack.c.l.b16 %v2235
    %v2332 = vunpack.c.l.b16 %v2236
    %v2333 = vunpack.c.l.b16 %v2237
    %v2334 = vunpack.c.l.b16 %v2238
    %v2335 = vpack.c.b16 %v2288, %v2287
    %v2336 = vpack.c.b16 %v2290, %v2289
    %v2337 = vpack.c.b16 %v2292, %v2291
    %v2338 = vpack.c.b16 %v2294, %v2293
    %v2339 = vpack.c.b16 %v2296, %v2295
    %v2340 = vpack.c.b16 %v2298, %v2297
    %v2341 = vpack.c.b16 %v2300, %v2299
    %v2342 = vpack.c.b16 %v2302, %v2301
    %v2343 = vpack.c.b16 %v2304, %v2303
    %v2344 = vpack.c.b16 %v2306, %v2305
    %v2345 = vpack.c.b16 %v2308, %v2307
    %v2346 = vpack.c.b16 %v2310, %v2309
    %v2347 = vpack.c.b16 %v2312, %v2311
    %v2348 = vpack.c.b16 %v2314, %v2313
    %v2349 = vpack.c.b16 %v2316, %v2315
    %v2350 = vpack.c.b16 %v2318, %v2317
    %v2351 = vpack.c.b16 %v2320, %v2319
    %v2352 = vpack.c.b16 %v2322, %v2321
    %v2353 = vpack.c.b16 %v2324, %v2323
    %v2354 = vpack.c.b16 %v2326, %v2325
    %v2355 = vpack.c.b16 %v2328, %v2327
    %v2356 = vpack.c.b16 %v2330, %v2329
    %v2357 = vpack.c.b16 %v2332, %v2331
    %v2358 = vpack.c.b16 %v2334, %v2333
    %2383 = vmatprep.subr.bf16.mxu0 0
    %2384 = vmatpush1.bf16.msra.mxu0 %v2335
    %2385 = vmatprep.subr.bf16.mxu0 0
    %2386 = vmatpush1.bf16.msra.mxu0 %v2336
    %2387 = vmatprep.subr.bf16.mxu0 0
    %2388 = vmatpush1.bf16.msra.mxu0 %v2337
    %2389 = vmatprep.subr.bf16.mxu0 0
    %2390 = vmatpush1.bf16.msra.mxu0 %v2338
    %2391 = vmatprep.subr.bf16.mxu0 0
    %2392 = vmatpush1.bf16.msra.mxu0 %v2339
    %2393 = vmatprep.subr.bf16.mxu0 0
    %2394 = vmatpush1.bf16.msra.mxu0 %v2340
    %2395 = vmatprep.subr.bf16.mxu0 0
    %2396 = vmatpush1.bf16.msra.mxu0 %v2341
    %2397 = vmatprep.subr.bf16.mxu0 0
    %2398 = vmatpush1.bf16.msra.mxu0 %v2342
    %2399 = vmatprep.subr.bf16.mxu0 0
    %2400 = vmatpush1.bf16.msra.mxu0 %v2343
    %2401 = vmatprep.subr.bf16.mxu0 0
    %2402 = vmatpush1.bf16.msra.mxu0 %v2344
    %2403 = vmatprep.subr.bf16.mxu0 0
    %2404 = vmatpush1.bf16.msra.mxu0 %v2345
    %2405 = vmatprep.subr.bf16.mxu0 0
    %2406 = vmatpush1.bf16.msra.mxu0 %v2346
    %2407 = vmatprep.subr.bf16.mxu0 0
    %2408 = vmatpush1.bf16.msra.mxu0 %v2347
    %2409 = vmatprep.subr.bf16.mxu0 0
    %2410 = vmatpush1.bf16.msra.mxu0 %v2348
    %2411 = vmatprep.subr.bf16.mxu0 0
    %2412 = vmatpush1.bf16.msra.mxu0 %v2349
    %2413 = vmatprep.subr.bf16.mxu0 0
    %2414 = vmatpush1.bf16.msra.mxu0 %v2350
    %2415 = vmatprep.mubr.bf16.mxu0 %v2186
    %2416 = vmatmul.mubr.bf16.gmra.mrb[0].mxu0 %v2185
    %v2417 = vpop.f32.mrb[0].mxu0
    %v2418 = vadd.f32 0.0, %v2417
    %v2419 = vpop.f32.mrb[0].mxu0
    %v2420 = vpop.f32.mrb[0].mxu0
    %v2421 = vadd.f32 0.0, %v2420
    %v2422 = vpop.f32.mrb[0].mxu0
    %2423 = vmatprep.mubr.bf16.mxu0 %v2189
    %2424 = vmatmul.mubr.bf16.gmra.mrb[0].mxu0 %v2188
    %v2425 = vpop.f32.mrb[0].mxu0
    %v2426 = vadd.f32 0.0, %v2425
    %v2427 = vpop.f32.mrb[0].mxu0
    %v2428 = vpop.f32.mrb[0].mxu0
    %v2429 = vadd.f32 0.0, %v2428
    %v2430 = vpop.f32.mrb[0].mxu0
    %2431 = vdwg.mxu0
    %2432 = vmatprep.subr.bf16.mxu0 0
    %2433 = vmatpush1.bf16.msra.mxu0 %v2351
    %2434 = vmatprep.subr.bf16.mxu0 0
    %2435 = vmatpush1.bf16.msra.mxu0 %v2352
    %2436 = vmatprep.subr.bf16.mxu0 0
    %2437 = vmatpush1.bf16.msra.mxu0 %v2353
    %2438 = vmatprep.subr.bf16.mxu0 0
    %2439 = vmatpush1.bf16.msra.mxu0 %v2354
    %2440 = vmatprep.subr.bf16.mxu0 0
    %2441 = vmatpush1.bf16.msra.mxu0 %v2355
    %2442 = vmatprep.subr.bf16.mxu0 0
    %2443 = vmatpush1.bf16.msra.mxu0 %v2356
    %2444 = vmatprep.subr.bf16.mxu0 0
    %2445 = vmatpush1.bf16.msra.mxu0 %v2357
    %2446 = vmatprep.subr.bf16.mxu0 0
    %2447 = vmatpush1.bf16.msra.mxu0 %v2358
    %2448 = vmatprep.subr.bf16.mxu0 0
    %2449 = vmatpush1.bf16.msra.mxu0 0
    %2450 = vmatprep.subr.bf16.mxu0 0
    %2451 = vmatpush1.bf16.msra.mxu0 0
    %2452 = vmatprep.subr.bf16.mxu0 0
    %2453 = vmatpush1.bf16.msra.mxu0 0
    %2454 = vmatprep.subr.bf16.mxu0 0
    %2455 = vmatpush1.bf16.msra.mxu0 0
    %2456 = vmatprep.subr.bf16.mxu0 0
    %2457 = vmatpush1.bf16.msra.mxu0 0
    %2458 = vmatprep.subr.bf16.mxu0 0
    %2459 = vmatpush1.bf16.msra.mxu0 0
    %2460 = vmatprep.subr.bf16.mxu0 0
    %2461 = vmatpush1.bf16.msra.mxu0 0
    %2462 = vmatprep.subr.bf16.mxu0 0
    %2463 = vmatpush1.bf16.msra.mxu0 0
    %2464 = vmatprep.mubr.bf16.mxu0 0
    %2465 = vmatmul.mubr.bf16.gmra.mrb[0].mxu0 %v2187
    %v2466 = vpop.f32.mrb[0].mxu0
    %v2467 = vadd.f32 %v2418, %v2466
    %v2468 = vpop.f32.mrb[0].mxu0
    %v2469 = vpop.f32.mrb[0].mxu0
    %v2470 = vadd.f32 %v2421, %v2469
    %v2471 = vpop.f32.mrb[0].mxu0
    %2472 = vmatprep.mubr.bf16.mxu0 0
    %2473 = vmatmul.mubr.bf16.gmra.mrb[0].mxu0 %v2190
    %v2474 = vpop.f32.mrb[0].mxu0
    %v2475 = vadd.f32 %v2426, %v2474
    %v2476 = vpop.f32.mrb[0].mxu0
    %v2477 = vpop.f32.mrb[0].mxu0
    %v2478 = vadd.f32 %v2429, %v2477
    %v2479 = vpop.f32.mrb[0].mxu0
    %2480 = vdwg.mxu0
    %v2481 = vadd.f32 %v1599, %v2467
    %v2482 = vadd.f32 %v1600, %v2470
    %v2483 = vadd.f32 %v1601, %v2475
    %v2484 = vadd.f32 %v1602, %v2478
    %2485 = vst [vmem:[#allocation8] sm:$0xff] %v2481
    %2486 = vst [vmem:[#allocation8 + $0x8] sm:$0xff] %v2482
    %2487 = vst [vmem:[#allocation8 + $0x10] sm:$0xff] %v2483
    %2488 = vst [vmem:[#allocation8 + $0x18] sm:$0xff] %v2484
    // Predicated region
    $region38: #{tpu_custom_call.1} parent=1 // pred_check
      _
    $region39: #{tpu_custom_call.1} parent=1 // pred_check_branch
      %2490 = sbr.rel (0) target = $region41
    $region40: #{tpu_custom_call.1} parent=1 // pred_region
      %s2492 = ssub.s32 512, 512
      %2493 = vsyncadd [#allocation5], %s2492
      %s2494 = sshll.u32 [#allocation8], 4
      %s2495 = int_to_ptr.vmem [resolvable:$true] %s2494
      %2500 = dma.vmem_to_hbm [thread:$0]  %s2495, 512, %s7, [#allocation5], 128, 128, 8
    $region41: #{tpu_custom_call.1} parent=1 // pred_fallthru
      _
    // Predicated region
    $region42: #{tpu_custom_call.1} parent=1 // pred_check
      _
    $region43: #{tpu_custom_call.1} parent=1 // pred_check_branch
      %2502 = sbr.rel (0) target = $region45
    $region44: #{tpu_custom_call.1} parent=1 // pred_region
      %2503 = dma.done [#allocation5], 512
    $region45: #{tpu_custom_call.1} parent=1 // pred_fallthru
      _
    %2504 = vsyncpa [#allocation4], 1
    %2505 = vsyncpa [#allocation7], 1
    %2506 = vsyncpa [#allocation5], 1

</llo_original>
